<compile_context>
chip_gen: v7x
topology: tpu7x:2x2x1
jax: 0.10.0
libtpu: 0.0.40
codegen_flags: <defaults>
</compile_context>

<pallas_src>
import numpy as np
import jax
import jax.numpy as jnp
from jax.experimental import pallas as pl
from jax.experimental.pallas import tpu as pltpu

# bitsandbytes 4-bit codebooks (index -> dequantized value in [-1, 1])
NF4_CODE = (
    -1.0, -0.6961928009986877, -0.5250730514526367, -0.39491748809814453,
    -0.28444138169288635, -0.18477343022823334, -0.09105003625154495, 0.0,
    0.07958029955625534, 0.16093020141124725, 0.24611230194568634,
    0.33791524171829224, 0.44070982933044434, 0.5626170039176941,
    0.7229568362236023, 1.0,
)
FP4_CODE = (
    0.0, 0.0052083333, 0.6666666667, 1.0, 0.3333333333, 0.5, 0.1666666667, 0.25,
    -0.0, -0.0052083333, -0.6666666667, -1.0, -0.3333333333, -0.5,
    -0.1666666667, -0.25,
)


# ---------------- host-side "quantize" (what set_quantized_weight receives) ----
# TODO(synk): exact bitsandbytes F.quantize_nf4/fp4 state format is emulated with
# this deterministic in-script blockwise absmax quantizer (host-side setup only).
def select_quant_type(t):
    """NF4Quantization.quantize's ratio rule: fp4 if asymmetric, else nf4."""
    max_val = float(jnp.max(t))
    min_val = float(jnp.min(t))
    if max_val == 0.0:                 # guard: avoid div-by-zero / NaN ratio
        return "nf4", NF4_CODE
    ratio = -(min_val / max_val)
    if ratio < 0.5 or ratio > 2:
        return "fp4", FP4_CODE
    return "nf4", NF4_CODE


def quantize_blockwise(w2d, codebook, blocksize):
    """Blockwise absmax 4-bit quantization: codes in [0,16), one absmax / block."""
    n, k = w2d.shape
    g = k // blocksize
    wb = np.asarray(w2d, np.float32).reshape(n, g, blocksize)
    absmax = np.max(np.abs(wb), axis=-1)
    absmax = np.where(absmax == 0, 1.0, absmax).astype(np.float32)
    normed = wb / absmax[..., None]
    cb = np.asarray(codebook, np.float32)
    codes = np.argmin(np.abs(normed[..., None] - cb[None, None, None, :]), axis=-1)
    return codes.reshape(n, k).astype(np.uint8), absmax


def pack_nibbles(codes):
    """Pack col j (high nibble) with col j + K/2 (low nibble) into one uint8."""
    n, k = codes.shape
    half = k // 2
    return ((codes[:, :half] << 4) | codes[:, half:]).astype(np.uint8)


# ---------------- Pallas kernel ------------------------------------------------
def _codebook_select_tree(codes_i32, codebook):
    """16-entry codebook lookup as a 4-level binary select tree.

    15 selects + 4 bit tests (~23 elementwise VPU ops) vs. 32 for the naive
    16-way compare+select chain.  All values are constants, so each level-0
    select is a select between two immediates.
    """
    cb = [jnp.float32(c) for c in codebook]
    b0 = (codes_i32 & 1) != 0
    b1 = (codes_i32 & 2) != 0
    b2 = (codes_i32 & 4) != 0
    b3 = (codes_i32 & 8) != 0

    def pair(i):                          # resolve bit 0 between cb[2i] / cb[2i+1]
        return jnp.where(b0, cb[2 * i + 1], cb[2 * i])

    q0 = jnp.where(b1, pair(1), pair(0))  # upper bits (b3 b2) = 00
    q1 = jnp.where(b1, pair(3), pair(2))  # 01
    q2 = jnp.where(b1, pair(5), pair(4))  # 10
    q3 = jnp.where(b1, pair(7), pair(6))  # 11
    h0 = jnp.where(b2, q1, q0)
    h1 = jnp.where(b2, q3, q2)
    return jnp.where(b3, h1, h0)


def make_qlinear_kernel(w_codebook, khalf, bt, x_resident, chunk_cols):
    K = 2 * khalf

    def kernel(x_ref, wq_ref, wsc_ref, expand_ref, bias_ref, o_ref, w_scr):
        # ---- dequantize this weight N-tile exactly once, at the start of the
        #      inner (sequential) batch sweep; the bf16 result persists in
        #      scratch and is reused by every batch tile.
        @pl.when(pl.program_id(1) == 0)
        def _dequantize():
            # Blockwise absmax (tn, G) -> (tn, K) via the precomputed one-hot
            # expansion matrix on the MXU (exact: one nonzero term per column).
            scale = jax.lax.dot_general(
                wsc_ref[...], expand_ref[...], (((1,), (0,)), ((), ())),
                preferred_element_type=jnp.float32)              # (tn, K)

            # Unpack + codebook lookup in bounded static column chunks, writing
            # the two nibble halves straight into the bf16 scratch in original
            # column order (hi half -> cols [0,K/2), lo -> [K/2,K)).
            for c0 in range(0, khalf, chunk_cols):
                c1 = min(c0 + chunk_cols, khalf)
                p = wq_ref[:, c0:c1].astype(jnp.int32)           # packed codes
                hi = (p >> 4) & 0xF                              # cols [c0, c1)
                lo = p & 0xF                                     # cols [khalf+c0, khalf+c1)
                vals_hi = _codebook_select_tree(hi, w_codebook)  # f32
                vals_lo = _codebook_select_tree(lo, w_codebook)  # f32
                w_scr[:, c0:c1] = (vals_hi * scale[:, c0:c1]).astype(jnp.bfloat16)
                w_scr[:, khalf + c0:khalf + c1] = (
                    vals_lo * scale[:, khalf + c0:khalf + c1]).astype(jnp.bfloat16)

        # ---- y = x @ W^T + b  (bf16 MXU matmul, f32 accumulation)
        if x_resident:
            # whole batch is resident in VMEM (DMA'd once); slice this tile
            b_off = pl.multiple_of(pl.program_id(1) * bt, bt)
            x_tile = x_ref[pl.ds(b_off, bt), :]                  # (bt, K) bf16
        else:
            x_tile = x_ref[...]                                  # (bt, K) bf16

        acc = jax.lax.dot_general(
            x_tile, w_scr[...], (((1,), (1,)), ((), ())),
            preferred_element_type=jnp.float32)                  # (bt, tn)
        o_ref[...] = (acc + bias_ref[...]).astype(o_ref.dtype)

    return kernel


def _chip_kind():
    try:
        return jax.devices()[0].device_kind.lower()
    except Exception:
        return ""


def quantized_linear(x, wq_packed, w_scales, bq_packed, b_scale,
                     w_codebook, b_codebook, *, blocksize,
                     batch_tile=None, n_tile=None, out_dtype=jnp.float32,
                     x_resident_budget=None, dequant_chunk_cols=1024):
    """y = x @ dequant(W)^T + dequant(b), with W/b 4-bit blockwise-quantized."""
    assert x.ndim == 2
    B, K = x.shape
    N, G = w_scales.shape
    khalf = K // 2
    assert wq_packed.shape == (N, khalf)
    assert K % (2 * blocksize) == 0, "in_features must be a multiple of 2*blocksize"
    assert G == K // blocksize
    assert khalf % 128 == 0, "in_features/2 must be a multiple of 128 (aligned halves)"
    assert N % 128 == 0, "out_features must be a multiple of 128 (lane-dense output)"
    assert bq_packed.shape == (1, N // 2) and b_scale.shape == (1, 1), \
        "bias must be absmax-quantized with a single block covering all N"

    kind = _chip_kind()
    is_v7 = "v7" in kind
    is_v6 = "v6" in kind
    is_v5 = "v5" in kind

    # Tile defaults per generation (v5e/v6e: 128 MiB VMEM -> bigger tiles; v7x:
    # 64 MiB VMEM -> keep n_tile <= 256 and rely on its 2 TCs via the parallel axis).
    if n_tile is None:
        if (is_v5 or is_v6) and N % 512 == 0:
            n_tile = 512
        elif N % 256 == 0:
            n_tile = 256
        else:
            n_tile = 128
    assert N % n_tile == 0
    if batch_tile is None:
        batch_tile = 256 if ((is_v6 or is_v7) and B >= 256) else 128

    # Fill the MXU M dimension: pad the batch to the batch tile and trim after.
    bt = batch_tile if B >= batch_tile else max(8, -(-B // 8) * 8)
    b_pad = -(-B // bt) * bt

    # bf16 x in the wrapper: halves x HBM traffic and removes a per-step cast.
    x_p = x.astype(jnp.bfloat16)
    if b_pad != B:
        x_p = jnp.pad(x_p, ((0, b_pad - B), (0, 0)))

    # Keep the whole (padded) batch resident in VMEM when it fits the budget, so
    # x is fetched from HBM once instead of once per N-tile (2x = buffer pair).
    if x_resident_budget is None:
        x_resident_budget = (24 << 20) if is_v7 else (48 << 20)
    x_resident = (2 * b_pad * K * 2) <= x_resident_budget

    # Dequantize the bias in the wrapper (only N floats) -> (1, N) f32 input.
    cb_b = jnp.asarray(b_codebook, jnp.float32)
    bp = bq_packed.astype(jnp.int32)
    b_codes = jnp.concatenate([(bp >> 4) & 0xF, bp & 0xF], axis=1)       # (1, N)
    bias_deq = cb_b[b_codes] * b_scale[0, 0]                             # (1, N) f32

    # One-hot blockwise-scale expansion matrix (G, K), built once on the host.
    expand = jnp.asarray(
        (np.arange(K)[None, :] // blocksize == np.arange(G)[:, None]).astype(np.float32))

    chunk_cols = max(128, min(int(dequant_chunk_cols), khalf))
    kernel = make_qlinear_kernel(w_codebook, khalf, bt, x_resident, chunk_cols)
    grid = (N // n_tile, b_pad // bt)     # N tiles outer (parallel), batch inner

    if x_resident:
        x_spec = pl.BlockSpec((b_pad, K), lambda j, i: (0, 0))   # constant -> one DMA
    else:
        x_spec = pl.BlockSpec((bt, K), lambda j, i: (i, 0))      # streamed per tile

    # VMEM budget -> scoped limit (default scoped limit is too small on v5e).
    out_bytes = np.dtype(out_dtype).itemsize
    vmem_est = (
        (2 * b_pad * K * 2 if x_resident else 2 * bt * K * 2)    # x buffers
        + 2 * n_tile * khalf                                     # packed codes
        + 2 * n_tile * G * 4                                     # blockwise absmax
        + 2 * G * K * 4                                          # expand matrix
        + 2 * n_tile * 4                                         # bias tile
        + 2 * bt * n_tile * out_bytes                            # output buffers
        + n_tile * K * 2                                         # w_scr (bf16)
        + n_tile * K * 4                                         # scale temp (f32)
        + 6 * n_tile * chunk_cols * 4)                           # dequant chunk temps
    vmem_limit = int(min(96 << 20, max(32 << 20, int(vmem_est * 1.25) + (2 << 20))))

    out = pl.pallas_call(
        kernel,
        out_shape=jax.ShapeDtypeStruct((b_pad, N), out_dtype),
        grid=grid,
        in_specs=[
            x_spec,                                               # x (bf16)
            pl.BlockSpec((n_tile, khalf), lambda j, i: (j, 0)),   # packed W codes
            pl.BlockSpec((n_tile, G), lambda j, i: (j, 0)),       # W absmax / block
            pl.BlockSpec((G, K), lambda j, i: (0, 0)),            # scale expansion
            pl.BlockSpec((1, n_tile), lambda j, i: (0, j)),       # dequantized bias
        ],
        out_specs=pl.BlockSpec((bt, n_tile), lambda j, i: (i, j)),
        scratch_shapes=[
            pltpu.VMEM((n_tile, K), jnp.bfloat16),   # dequantized weight tile (cached)
        ],
        compiler_params=pltpu.CompilerParams(
            dimension_semantics=("parallel", "arbitrary"),
            vmem_limit_bytes=vmem_limit),
    )(x_p, wq_packed, w_scales, expand, bias_deq)
    return out[:B] if b_pad != B else out


# ---------------- demo ----------------------------------------------------------
if __name__ == "__main__":
    B, K, N = 16, 256, 128    # batch, in_features, out_features (lane-aligned)
    BS = 64                   # quantization block size (absmax granularity)

    key = jax.random.PRNGKey(0)
    kx, kw, kb = jax.random.split(key, 3)
    x = jax.random.normal(kx, (B, K), jnp.float32)
    w = 0.02 * jax.random.normal(kw, (N, K), jnp.float32)     # nn.Linear-style weight
    bias = 0.02 * jax.random.normal(kb, (N,), jnp.float32)

    # Deterministic in-script quantization (stand-in for bitsandbytes quantize_nf4/fp4)
    w_qtype, w_cb = select_quant_type(w)
    b_qtype, b_cb = select_quant_type(bias)
    w_codes, w_scales = quantize_blockwise(np.asarray(w), w_cb, BS)
    b_codes, b_scale = quantize_blockwise(np.asarray(bias).reshape(1, N), b_cb, N)
    wq_packed = pack_nibbles(w_codes)
    bq_packed = pack_nibbles(b_codes)

    out = quantized_linear(
        x, jnp.asarray(wq_packed), jnp.asarray(w_scales),
        jnp.asarray(bq_packed), jnp.asarray(b_scale),
        w_cb, b_cb, blocksize=BS)
    out = jax.block_until_ready(out)

    # Pure numpy reference: dequantize then linear (mirrors the kernel's bf16
    # rounding of the dequantized weight and of x; accumulation stays f32).
    w_cb_np = np.asarray(w_cb, np.float32)
    b_cb_np = np.asarray(b_cb, np.float32)
    w_deq = w_cb_np[w_codes] * np.repeat(w_scales, BS, axis=1)
    b_deq = (b_cb_np[b_codes] * b_scale).reshape(N)
    w_bf = np.asarray(jnp.asarray(w_deq).astype(jnp.bfloat16).astype(jnp.float32))
    x_bf = np.asarray(x.astype(jnp.bfloat16).astype(jnp.float32))
    ref = x_bf @ w_bf.T + b_deq

    np.testing.assert_allclose(np.asarray(out), ref, rtol=1e-2, atol=1e-2)
    print("KERNEL_OK")
</pallas_src>

<mosaic_0001>
module attributes {stable_mosaic.version = 11 : i64} {
  func.func @kernel(%arg0: i32, %arg1: i32, %arg2: memref<16x256xbf16, #tpu.memory_space<vmem>>, %arg3: memref<128x128xi8, #tpu.memory_space<vmem>>, %arg4: memref<128x4xf32, #tpu.memory_space<vmem>>, %arg5: memref<4x256xf32, #tpu.memory_space<vmem>>, %arg6: memref<1x128xf32, #tpu.memory_space<vmem>>, %arg7: memref<16x128xf32, #tpu.memory_space<vmem>>, %arg8: memref<128x256xbf16, #tpu.memory_space<vmem>>) attributes {dimension_semantics = [#tpu.dimension_semantics<parallel>, #tpu.dimension_semantics<arbitrary>], iteration_bounds = array<i64: 1, 1>, scalar_prefetch = 0 : i64, scratch_operands = 1 : i64, tpu.core_type = #tpu.core_type<tc>, window_params = [{pipeline_mode = #tpu.pipeline_mode<synchronous>, transform_indices = @transform_0, window_bounds = array<i64: 16, 256>}, {transform_indices = @transform_1, window_bounds = array<i64: 128, 128>}, {transform_indices = @transform_2, window_bounds = array<i64: 128, 4>}, {pipeline_mode = #tpu.pipeline_mode<synchronous>, transform_indices = @transform_3, window_bounds = array<i64: 4, 256>}, {transform_indices = @transform_4, window_bounds = array<i64: 1, 128>}, {transform_indices = @transform_5, window_bounds = array<i64: 16, 128>}]} {
    %c0_i32 = arith.constant 0 : i32
    %0 = arith.cmpi eq, %arg1, %c0_i32 : i32
    %1 = arith.extui %0 : i1 to i32
    %c0_i32_0 = arith.constant 0 : i32
    %2 = arith.cmpi ne, %1, %c0_i32_0 : i32
    scf.if %2 {
      %c0_7 = arith.constant 0 : index
      %c0_8 = arith.constant 0 : index
      %13 = vector.load %arg4[%c0_7, %c0_8] : memref<128x4xf32, #tpu.memory_space<vmem>>, vector<128x4xf32>
      %c0_9 = arith.constant 0 : index
      %c0_10 = arith.constant 0 : index
      %14 = vector.load %arg5[%c0_9, %c0_10] : memref<4x256xf32, #tpu.memory_space<vmem>>, vector<4x256xf32>
      %cst_11 = arith.constant dense<0.000000e+00> : vector<128x256xf32>
      %15 = tpu.matmul %13, %14, %cst_11 {dimension_numbers = #tpu.dot_dimension_numbers<[1], [0], [0], [1], [0, 0, 1, 1], [], []>} : vector<128x4xf32>, vector<4x256xf32>, vector<128x256xf32> -> vector<128x256xf32>
      %c0_12 = arith.constant 0 : index
      %c0_13 = arith.constant 0 : index
      %16 = vector.load %arg3[%c0_12, %c0_13] : memref<128x128xi8, #tpu.memory_space<vmem>>, vector<128x128xi8>
      %17 = arith.extui %16 : vector<128x128xi8> to vector<128x128xi32>
      %c4_i32 = arith.constant 4 : i32
      %18 = vector.broadcast %c4_i32 : i32 to vector<128x128xi32>
      %19 = arith.shrsi %17, %18 : vector<128x128xi32>
      %c15_i32 = arith.constant 15 : i32
      %20 = vector.broadcast %c15_i32 : i32 to vector<128x128xi32>
      %21 = arith.andi %19, %20 : vector<128x128xi32>
      %c15_i32_14 = arith.constant 15 : i32
      %22 = vector.broadcast %c15_i32_14 : i32 to vector<128x128xi32>
      %23 = arith.andi %17, %22 : vector<128x128xi32>
      %c1_i32 = arith.constant 1 : i32
      %24 = vector.broadcast %c1_i32 : i32 to vector<128x128xi32>
      %25 = arith.andi %21, %24 : vector<128x128xi32>
      %c0_i32_15 = arith.constant 0 : i32
      %26 = vector.broadcast %c0_i32_15 : i32 to vector<128x128xi32>
      %27 = arith.cmpi ne, %25, %26 : vector<128x128xi32>
      %c2_i32 = arith.constant 2 : i32
      %28 = vector.broadcast %c2_i32 : i32 to vector<128x128xi32>
      %29 = arith.andi %21, %28 : vector<128x128xi32>
      %c0_i32_16 = arith.constant 0 : i32
      %30 = vector.broadcast %c0_i32_16 : i32 to vector<128x128xi32>
      %31 = arith.cmpi ne, %29, %30 : vector<128x128xi32>
      %c4_i32_17 = arith.constant 4 : i32
      %32 = vector.broadcast %c4_i32_17 : i32 to vector<128x128xi32>
      %33 = arith.andi %21, %32 : vector<128x128xi32>
      %c0_i32_18 = arith.constant 0 : i32
      %34 = vector.broadcast %c0_i32_18 : i32 to vector<128x128xi32>
      %35 = arith.cmpi ne, %33, %34 : vector<128x128xi32>
      %c8_i32 = arith.constant 8 : i32
      %36 = vector.broadcast %c8_i32 : i32 to vector<128x128xi32>
      %37 = arith.andi %21, %36 : vector<128x128xi32>
      %c0_i32_19 = arith.constant 0 : i32
      %38 = vector.broadcast %c0_i32_19 : i32 to vector<128x128xi32>
      %39 = arith.cmpi ne, %37, %38 : vector<128x128xi32>
      %cst_20 = arith.constant -0.394917488 : f32
      %cst_21 = arith.constant -0.525073051 : f32
      %40 = vector.broadcast %cst_20 : f32 to vector<128x128xf32>
      %41 = vector.broadcast %cst_21 : f32 to vector<128x128xf32>
      %42 = arith.select %27, %40, %41 : vector<128x128xi1>, vector<128x128xf32>
      %cst_22 = arith.constant -0.6961928 : f32
      %cst_23 = arith.constant -1.000000e+00 : f32
      %43 = vector.broadcast %cst_22 : f32 to vector<128x128xf32>
      %44 = vector.broadcast %cst_23 : f32 to vector<128x128xf32>
      %45 = arith.select %27, %43, %44 : vector<128x128xi1>, vector<128x128xf32>
      %46 = arith.select %31, %42, %45 : vector<128x128xi1>, vector<128x128xf32>
      %cst_24 = arith.constant 0.000000e+00 : f32
      %cst_25 = arith.constant -0.0910500362 : f32
      %47 = vector.broadcast %cst_24 : f32 to vector<128x128xf32>
      %48 = vector.broadcast %cst_25 : f32 to vector<128x128xf32>
      %49 = arith.select %27, %47, %48 : vector<128x128xi1>, vector<128x128xf32>
      %cst_26 = arith.constant -0.18477343 : f32
      %cst_27 = arith.constant -0.284441382 : f32
      %50 = vector.broadcast %cst_26 : f32 to vector<128x128xf32>
      %51 = vector.broadcast %cst_27 : f32 to vector<128x128xf32>
      %52 = arith.select %27, %50, %51 : vector<128x128xi1>, vector<128x128xf32>
      %53 = arith.select %31, %49, %52 : vector<128x128xi1>, vector<128x128xf32>
      %cst_28 = arith.constant 0.337915242 : f32
      %cst_29 = arith.constant 0.246112302 : f32
      %54 = vector.broadcast %cst_28 : f32 to vector<128x128xf32>
      %55 = vector.broadcast %cst_29 : f32 to vector<128x128xf32>
      %56 = arith.select %27, %54, %55 : vector<128x128xi1>, vector<128x128xf32>
      %cst_30 = arith.constant 0.160930201 : f32
      %cst_31 = arith.constant 0.0795802995 : f32
      %57 = vector.broadcast %cst_30 : f32 to vector<128x128xf32>
      %58 = vector.broadcast %cst_31 : f32 to vector<128x128xf32>
      %59 = arith.select %27, %57, %58 : vector<128x128xi1>, vector<128x128xf32>
      %60 = arith.select %31, %56, %59 : vector<128x128xi1>, vector<128x128xf32>
      %cst_32 = arith.constant 1.000000e+00 : f32
      %cst_33 = arith.constant 0.722956836 : f32
      %61 = vector.broadcast %cst_32 : f32 to vector<128x128xf32>
      %62 = vector.broadcast %cst_33 : f32 to vector<128x128xf32>
      %63 = arith.select %27, %61, %62 : vector<128x128xi1>, vector<128x128xf32>
      %cst_34 = arith.constant 5.626170e-01 : f32
      %cst_35 = arith.constant 0.440709829 : f32
      %64 = vector.broadcast %cst_34 : f32 to vector<128x128xf32>
      %65 = vector.broadcast %cst_35 : f32 to vector<128x128xf32>
      %66 = arith.select %27, %64, %65 : vector<128x128xi1>, vector<128x128xf32>
      %67 = arith.select %31, %63, %66 : vector<128x128xi1>, vector<128x128xf32>
      %68 = arith.select %35, %53, %46 : vector<128x128xi1>, vector<128x128xf32>
      %69 = arith.select %35, %67, %60 : vector<128x128xi1>, vector<128x128xf32>
      %70 = arith.select %39, %69, %68 : vector<128x128xi1>, vector<128x128xf32>
      %c1_i32_36 = arith.constant 1 : i32
      %71 = vector.broadcast %c1_i32_36 : i32 to vector<128x128xi32>
      %72 = arith.andi %23, %71 : vector<128x128xi32>
      %c0_i32_37 = arith.constant 0 : i32
      %73 = vector.broadcast %c0_i32_37 : i32 to vector<128x128xi32>
      %74 = arith.cmpi ne, %72, %73 : vector<128x128xi32>
      %c2_i32_38 = arith.constant 2 : i32
      %75 = vector.broadcast %c2_i32_38 : i32 to vector<128x128xi32>
      %76 = arith.andi %23, %75 : vector<128x128xi32>
      %c0_i32_39 = arith.constant 0 : i32
      %77 = vector.broadcast %c0_i32_39 : i32 to vector<128x128xi32>
      %78 = arith.cmpi ne, %76, %77 : vector<128x128xi32>
      %c4_i32_40 = arith.constant 4 : i32
      %79 = vector.broadcast %c4_i32_40 : i32 to vector<128x128xi32>
      %80 = arith.andi %23, %79 : vector<128x128xi32>
      %c0_i32_41 = arith.constant 0 : i32
      %81 = vector.broadcast %c0_i32_41 : i32 to vector<128x128xi32>
      %82 = arith.cmpi ne, %80, %81 : vector<128x128xi32>
      %c8_i32_42 = arith.constant 8 : i32
      %83 = vector.broadcast %c8_i32_42 : i32 to vector<128x128xi32>
      %84 = arith.andi %23, %83 : vector<128x128xi32>
      %c0_i32_43 = arith.constant 0 : i32
      %85 = vector.broadcast %c0_i32_43 : i32 to vector<128x128xi32>
      %86 = arith.cmpi ne, %84, %85 : vector<128x128xi32>
      %cst_44 = arith.constant -0.394917488 : f32
      %cst_45 = arith.constant -0.525073051 : f32
      %87 = vector.broadcast %cst_44 : f32 to vector<128x128xf32>
      %88 = vector.broadcast %cst_45 : f32 to vector<128x128xf32>
      %89 = arith.select %74, %87, %88 : vector<128x128xi1>, vector<128x128xf32>
      %cst_46 = arith.constant -0.6961928 : f32
      %cst_47 = arith.constant -1.000000e+00 : f32
      %90 = vector.broadcast %cst_46 : f32 to vector<128x128xf32>
      %91 = vector.broadcast %cst_47 : f32 to vector<128x128xf32>
      %92 = arith.select %74, %90, %91 : vector<128x128xi1>, vector<128x128xf32>
      %93 = arith.select %78, %89, %92 : vector<128x128xi1>, vector<128x128xf32>
      %cst_48 = arith.constant 0.000000e+00 : f32
      %cst_49 = arith.constant -0.0910500362 : f32
      %94 = vector.broadcast %cst_48 : f32 to vector<128x128xf32>
      %95 = vector.broadcast %cst_49 : f32 to vector<128x128xf32>
      %96 = arith.select %74, %94, %95 : vector<128x128xi1>, vector<128x128xf32>
      %cst_50 = arith.constant -0.18477343 : f32
      %cst_51 = arith.constant -0.284441382 : f32
      %97 = vector.broadcast %cst_50 : f32 to vector<128x128xf32>
      %98 = vector.broadcast %cst_51 : f32 to vector<128x128xf32>
      %99 = arith.select %74, %97, %98 : vector<128x128xi1>, vector<128x128xf32>
      %100 = arith.select %78, %96, %99 : vector<128x128xi1>, vector<128x128xf32>
      %cst_52 = arith.constant 0.337915242 : f32
      %cst_53 = arith.constant 0.246112302 : f32
      %101 = vector.broadcast %cst_52 : f32 to vector<128x128xf32>
      %102 = vector.broadcast %cst_53 : f32 to vector<128x128xf32>
      %103 = arith.select %74, %101, %102 : vector<128x128xi1>, vector<128x128xf32>
      %cst_54 = arith.constant 0.160930201 : f32
      %cst_55 = arith.constant 0.0795802995 : f32
      %104 = vector.broadcast %cst_54 : f32 to vector<128x128xf32>
      %105 = vector.broadcast %cst_55 : f32 to vector<128x128xf32>
      %106 = arith.select %74, %104, %105 : vector<128x128xi1>, vector<128x128xf32>
      %107 = arith.select %78, %103, %106 : vector<128x128xi1>, vector<128x128xf32>
      %cst_56 = arith.constant 1.000000e+00 : f32
      %cst_57 = arith.constant 0.722956836 : f32
      %108 = vector.broadcast %cst_56 : f32 to vector<128x128xf32>
      %109 = vector.broadcast %cst_57 : f32 to vector<128x128xf32>
      %110 = arith.select %74, %108, %109 : vector<128x128xi1>, vector<128x128xf32>
      %cst_58 = arith.constant 5.626170e-01 : f32
      %cst_59 = arith.constant 0.440709829 : f32
      %111 = vector.broadcast %cst_58 : f32 to vector<128x128xf32>
      %112 = vector.broadcast %cst_59 : f32 to vector<128x128xf32>
      %113 = arith.select %74, %111, %112 : vector<128x128xi1>, vector<128x128xf32>
      %114 = arith.select %78, %110, %113 : vector<128x128xi1>, vector<128x128xf32>
      %115 = arith.select %82, %100, %93 : vector<128x128xi1>, vector<128x128xf32>
      %116 = arith.select %82, %114, %107 : vector<128x128xi1>, vector<128x128xf32>
      %117 = arith.select %86, %116, %115 : vector<128x128xi1>, vector<128x128xf32>
      %118 = vector.extract_strided_slice %15 {offsets = [0, 0], sizes = [128, 128], strides = [1, 1]} : vector<128x256xf32> to vector<128x128xf32>
      %119 = arith.mulf %70, %118 : vector<128x128xf32>
      %120 = arith.truncf %119 : vector<128x128xf32> to vector<128x128xbf16>
      %c0_60 = arith.constant 0 : index
      %c0_61 = arith.constant 0 : index
      %121 = vector.load %arg8[%c0_60, %c0_61] : memref<128x256xbf16, #tpu.memory_space<vmem>>, vector<128x128xbf16>
      tpu.vector_store %arg8[%c0_60, %c0_61], %120 {strides = array<i32>} : memref<128x256xbf16, #tpu.memory_space<vmem>>, vector<128x128xbf16>,
      %122 = vector.extract_strided_slice %15 {offsets = [0, 128], sizes = [128, 128], strides = [1, 1]} : vector<128x256xf32> to vector<128x128xf32>
      %123 = arith.mulf %117, %122 : vector<128x128xf32>
      %124 = arith.truncf %123 : vector<128x128xf32> to vector<128x128xbf16>
      %c0_62 = arith.constant 0 : index
      %c128 = arith.constant 128 : index
      %125 = vector.load %arg8[%c0_62, %c128] : memref<128x256xbf16, #tpu.memory_space<vmem>>, vector<128x128xbf16>
      tpu.vector_store %arg8[%c0_62, %c128], %124 {strides = array<i32>} : memref<128x256xbf16, #tpu.memory_space<vmem>>, vector<128x128xbf16>,
    } else {
    }
    %c16_i32 = arith.constant 16 : i32
    %3 = arith.muli %arg1, %c16_i32 : i32
    %4 = tpu.assume_multiple %3, 16 : i32
    %5 = arith.index_cast %4 : i32 to index
    %c0 = arith.constant 0 : index
    %6 = vector.load %arg2[%5, %c0] : memref<16x256xbf16, #tpu.memory_space<vmem>>, vector<16x256xbf16>
    %c0_1 = arith.constant 0 : index
    %c0_2 = arith.constant 0 : index
    %7 = vector.load %arg8[%c0_1, %c0_2] : memref<128x256xbf16, #tpu.memory_space<vmem>>, vector<128x256xbf16>
    %cst = arith.constant dense<0.000000e+00> : vector<16x128xf32>
    %8 = tpu.matmul %6, %7, %cst {dimension_numbers = #tpu.dot_dimension_numbers<[1], [1], [0], [0], [0, 0, 1, 0], [], []>} : vector<16x256xbf16>, vector<128x256xbf16>, vector<16x128xf32> -> vector<16x128xf32>
    %c0_3 = arith.constant 0 : index
    %c0_4 = arith.constant 0 : index
    %9 = vector.load %arg6[%c0_3, %c0_4] : memref<1x128xf32, #tpu.memory_space<vmem>>, vector<1x128xf32>
    %10 = vector.broadcast %9 : vector<1x128xf32> to vector<16x128xf32>
    %11 = arith.addf %8, %10 : vector<16x128xf32>
    %c0_5 = arith.constant 0 : index
    %c0_6 = arith.constant 0 : index
    %12 = vector.load %arg7[%c0_5, %c0_6] : memref<16x128xf32, #tpu.memory_space<vmem>>, vector<16x128xf32>
    tpu.vector_store %arg7[%c0_5, %c0_6], %11 {strides = array<i32>} : memref<16x128xf32, #tpu.memory_space<vmem>>, vector<16x128xf32>,
    return
  }
  func.func @transform_0(%arg0: i32, %arg1: i32) -> (i32, i32) {
    %c0_i32 = arith.constant 0 : i32
    %c0_i32_0 = arith.constant 0 : i32
    %c0_i32_1 = arith.constant 0 : i32
    return %c0_i32, %c0_i32_0 : i32, i32
  }
  func.func @transform_1(%arg0: i32, %arg1: i32) -> (i32, i32) {
    %c0_i32 = arith.constant 0 : i32
    %c0_i32_0 = arith.constant 0 : i32
    return %arg0, %c0_i32 : i32, i32
  }
  func.func @transform_2(%arg0: i32, %arg1: i32) -> (i32, i32) {
    %c0_i32 = arith.constant 0 : i32
    %c0_i32_0 = arith.constant 0 : i32
    return %arg0, %c0_i32 : i32, i32
  }
  func.func @transform_3(%arg0: i32, %arg1: i32) -> (i32, i32) {
    %c0_i32 = arith.constant 0 : i32
    %c0_i32_0 = arith.constant 0 : i32
    %c0_i32_1 = arith.constant 0 : i32
    return %c0_i32, %c0_i32_0 : i32, i32
  }
  func.func @transform_4(%arg0: i32, %arg1: i32) -> (i32, i32) {
    %c0_i32 = arith.constant 0 : i32
    %c0_i32_0 = arith.constant 0 : i32
    return %c0_i32, %arg0 : i32, i32
  }
  func.func @transform_5(%arg0: i32, %arg1: i32) -> (i32, i32) {
    %c0_i32 = arith.constant 0 : i32
    return %arg1, %arg0 : i32, i32
  }
}

</mosaic_0001>

<llo_original>
// kernel: tpu_custom_call.1
$region0: #{tpu_custom_call.1}
  #allocation0 [shape = 'u32[]', space=smem, size = 0x4, offset = 0x4, fixed_abs, tag = 'smem constant byte address 0x4 - core index']
  #allocation1 [shape = 'u32[144,128]{1,0:T(1,128)}', space=vmem, size = 0x12000, scoped, tag = 'internal scratch']
  #allocation2 [shape = 'bf16[128,256]{1,0:T(16,128)(2,1)}', space=vmem, size = 0x10000, scoped, tag = 'scratch operand']
  %s0 = inlined_call_operand.vmem [shape: bf16[16,256], index: 0, kind: input, shape index: {}]
  %s1 = inlined_call_operand.vmem [shape: u8[128,128], index: 1, kind: input, shape index: {}]
  %s2 = inlined_call_operand.vmem [shape: f32[128,4], index: 2, kind: input, shape index: {}]
  %s3 = inlined_call_operand.vmem [shape: f32[4,256], index: 3, kind: input, shape index: {}]
  %s4 = inlined_call_operand.vmem [shape: f32[1,128], index: 4, kind: input, shape index: {}]
  %s5 = inlined_call_operand.hbm [shape: f32[16,128], index: 5, kind: output, shape index: {}]
  %s6 = sld [smem:[#allocation0]]
  $region34: #{tpu_custom_call.1} parent=0
    _
  %s8 = ssub.s32 1, %s6
  %s9 = scalar_select 0, %s8, %s6
  $region1: #{tpu_custom_call.1} parent=0
    #allocation3 [shape = 'u8[8192]{0}', space=vmem, size = 0x2000, scoped, tag = 'output window, operand 0, single buffered']
    #allocation4 [shape = 's32[1]{0}', space=sflag, size = 0x4, scoped, tag = 'scoped memory for tpu_custom_call.1']
    %10 = vsyncpa [#allocation4], 0
    // Predicated region
    $region2: #{tpu_custom_call.1} parent=1 // pred_check
      _
    $region3: #{tpu_custom_call.1} parent=1 // pred_check_branch
      %12 = sbr.rel (0) target = $region5
    $region4: #{tpu_custom_call.1} parent=1 // pred_region
      _
    $region5: #{tpu_custom_call.1} parent=1 // pred_fallthru
      _
    // Predicated region
    $region6: #{tpu_custom_call.1} parent=1 // pred_check
      _
    $region7: #{tpu_custom_call.1} parent=1 // pred_check_branch
      %14 = sbr.rel (0) target = $region9
    $region8: #{tpu_custom_call.1} parent=1 // pred_region
      _
    $region9: #{tpu_custom_call.1} parent=1 // pred_fallthru
      _
    // Predicated region
    $region10: #{tpu_custom_call.1} parent=1 // pred_check
      _
    $region11: #{tpu_custom_call.1} parent=1 // pred_check_branch
      %16 = sbr.rel (0) target = $region13
    $region12: #{tpu_custom_call.1} parent=1 // pred_region
      _
    $region13: #{tpu_custom_call.1} parent=1 // pred_fallthru
      _
    // Predicated region
    $region14: #{tpu_custom_call.1} parent=1 // pred_check
      _
    $region15: #{tpu_custom_call.1} parent=1 // pred_check_branch
      %18 = sbr.rel (0) target = $region17
    $region16: #{tpu_custom_call.1} parent=1 // pred_region
      _
    $region17: #{tpu_custom_call.1} parent=1 // pred_fallthru
      _
    // Predicated region
    $region18: #{tpu_custom_call.1} parent=1 // pred_check
      _
    $region19: #{tpu_custom_call.1} parent=1 // pred_check_branch
      %20 = sbr.rel (0) target = $region21
    $region20: #{tpu_custom_call.1} parent=1 // pred_region
      _
    $region21: #{tpu_custom_call.1} parent=1 // pred_fallthru
      _
    %p22 = scmp.eq.s32.totalorder 0, 0
    // Predicated region
    $region22: #{tpu_custom_call.1} parent=1 // pred_check
      %p23 = pneg %p22
    $region23: #{tpu_custom_call.1} parent=1 // pred_check_branch
      %25 = sbr.rel (%p23) target = $region25
    $region24: #{tpu_custom_call.1} parent=1 // pred_region
      %v26 = vld [vmem:[%s2] sm:$0xff]
      %v27 = vld [vmem:[%s2 + $0x8] sm:$0xff]
      %v28 = vld [vmem:[%s2 + $0x10] sm:$0xff]
      %v29 = vld [vmem:[%s2 + $0x18] sm:$0xff]
      %v30 = vld [vmem:[%s2 + $0x20] sm:$0xff]
      %v31 = vld [vmem:[%s2 + $0x28] sm:$0xff]
      %v32 = vld [vmem:[%s2 + $0x30] sm:$0xff]
      %v33 = vld [vmem:[%s2 + $0x38] sm:$0xff]
      %v34 = vld [vmem:[%s2 + $0x40] sm:$0xff]
      %v35 = vld [vmem:[%s2 + $0x48] sm:$0xff]
      %v36 = vld [vmem:[%s2 + $0x50] sm:$0xff]
      %v37 = vld [vmem:[%s2 + $0x58] sm:$0xff]
      %v38 = vld [vmem:[%s2 + $0x60] sm:$0xff]
      %v39 = vld [vmem:[%s2 + $0x68] sm:$0xff]
      %v40 = vld [vmem:[%s2 + $0x70] sm:$0xff]
      %v41 = vld [vmem:[%s2 + $0x78] sm:$0xff]
      %v42 = vld [vmem:[%s3] sm:$0xff]
      %v44 = vcombine.high %v42, %v42
      %vm45 = vcmask 31744
      %v47 = vsel %vm45, %v26, 0
      %v50 = vsel %vm45, %v27, 0
      %v53 = vsel %vm45, %v28, 0
      %v56 = vsel %vm45, %v29, 0
      %v59 = vsel %vm45, %v30, 0
      %v62 = vsel %vm45, %v31, 0
      %v65 = vsel %vm45, %v32, 0
      %v68 = vsel %vm45, %v33, 0
      %v71 = vsel %vm45, %v34, 0
      %v74 = vsel %vm45, %v35, 0
      %v77 = vsel %vm45, %v36, 0
      %v80 = vsel %vm45, %v37, 0
      %v83 = vsel %vm45, %v38, 0
      %v86 = vsel %vm45, %v39, 0
      %v89 = vsel %vm45, %v40, 0
      %v92 = vsel %vm45, %v41, 0
      %vm94 = vcmask 1043456
      %v95 = vsel %vm94, %v42, 0
      %v97 = vsel %vm94, %v44, 0
      %99 = vmatprep.subr.mxu0 %v97
      %100 = vmatpush1.msra.mxu0 %v95
      %101 = vmatprep.subr.mxu0 0.0
      %102 = vmatpush1.msra.mxu0 0.0
      %103 = vmatprep.subr.mxu0 0.0
      %104 = vmatpush1.msra.mxu0 0.0
      %105 = vmatprep.subr.mxu0 0.0
      %106 = vmatpush1.msra.mxu0 0.0
      %107 = vmatprep.subr.mxu0 0.0
      %108 = vmatpush1.msra.mxu0 0.0
      %109 = vmatprep.subr.mxu0 0.0
      %110 = vmatpush1.msra.mxu0 0.0
      %111 = vmatprep.subr.mxu0 0.0
      %112 = vmatpush1.msra.mxu0 0.0
      %113 = vmatprep.subr.mxu0 0.0
      %114 = vmatpush1.msra.mxu0 0.0
      %115 = vmatprep.subr.mxu0 0.0
      %116 = vmatpush1.msra.mxu0 0.0
      %117 = vmatprep.subr.mxu0 0.0
      %118 = vmatpush1.msra.mxu0 0.0
      %119 = vmatprep.subr.mxu0 0.0
      %120 = vmatpush1.msra.mxu0 0.0
      %121 = vmatprep.subr.mxu0 0.0
      %122 = vmatpush1.msra.mxu0 0.0
      %123 = vmatprep.subr.mxu0 0.0
      %124 = vmatpush1.msra.mxu0 0.0
      %125 = vmatprep.subr.mxu0 0.0
      %126 = vmatpush1.msra.mxu0 0.0
      %127 = vmatprep.subr.mxu0 0.0
      %128 = vmatpush1.msra.mxu0 0.0
      %129 = vmatprep.subr.mxu0 0.0
      %130 = vmatpush1.msra.mxu0 0.0
      %131 = vmatprep.subr.mxu0 0.0
      %132 = vmatpush1.msra.mxu0 0.0
      %133 = vmatprep.subr.mxu0 0.0
      %134 = vmatpush1.msra.mxu0 0.0
      %135 = vmatprep.subr.mxu0 0.0
      %136 = vmatpush1.msra.mxu0 0.0
      %137 = vmatprep.subr.mxu0 0.0
      %138 = vmatpush1.msra.mxu0 0.0
      %139 = vmatprep.subr.mxu0 0.0
      %140 = vmatpush1.msra.mxu0 0.0
      %141 = vmatprep.subr.mxu0 0.0
      %142 = vmatpush1.msra.mxu0 0.0
      %143 = vmatprep.subr.mxu0 0.0
      %144 = vmatpush1.msra.mxu0 0.0
      %145 = vmatprep.subr.mxu0 0.0
      %146 = vmatpush1.msra.mxu0 0.0
      %147 = vmatprep.subr.mxu0 0.0
      %148 = vmatpush1.msra.mxu0 0.0
      %149 = vmatprep.subr.mxu0 0.0
      %150 = vmatpush1.msra.mxu0 0.0
      %151 = vmatprep.subr.mxu0 0.0
      %152 = vmatpush1.msra.mxu0 0.0
      %153 = vmatprep.subr.mxu0 0.0
      %154 = vmatpush1.msra.mxu0 0.0
      %155 = vmatprep.subr.mxu0 0.0
      %156 = vmatpush1.msra.mxu0 0.0
      %157 = vmatprep.subr.mxu0 0.0
      %158 = vmatpush1.msra.mxu0 0.0
      %159 = vmatprep.subr.mxu0 0.0
      %160 = vmatpush1.msra.mxu0 0.0
      %161 = vmatprep.subr.mxu0 0.0
      %162 = vmatpush1.msra.mxu0 0.0
      %163 = vmatprep.mubr.f32.mxu0 0.0
      %164 = vmatmul.mubr.f32.gmra.mrb[0].mxu0 %v47
      %v165 = vpop.f32.mrb[0].mxu0
      %v166 = vadd.f32 0.0, %v165
      %v167 = vpop.f32.mrb[0].mxu0
      %v168 = vadd.f32 0.0, %v167
      %169 = vmatprep.mubr.f32.mxu0 0.0
      %170 = vmatmul.mubr.f32.gmra.mrb[0].mxu0 %v50
      %v171 = vpop.f32.mrb[0].mxu0
      %v172 = vadd.f32 0.0, %v171
      %v173 = vpop.f32.mrb[0].mxu0
      %v174 = vadd.f32 0.0, %v173
      %175 = vmatprep.mubr.f32.mxu0 0.0
      %176 = vmatmul.mubr.f32.gmra.mrb[0].mxu0 %v53
      %v177 = vpop.f32.mrb[0].mxu0
      %v178 = vadd.f32 0.0, %v177
      %v179 = vpop.f32.mrb[0].mxu0
      %v180 = vadd.f32 0.0, %v179
      %181 = vmatprep.mubr.f32.mxu0 0.0
      %182 = vmatmul.mubr.f32.gmra.mrb[0].mxu0 %v56
      %v183 = vpop.f32.mrb[0].mxu0
      %v184 = vadd.f32 0.0, %v183
      %v185 = vpop.f32.mrb[0].mxu0
      %v186 = vadd.f32 0.0, %v185
      %187 = vmatprep.mubr.f32.mxu0 0.0
      %188 = vmatmul.mubr.f32.gmra.mrb[0].mxu0 %v59
      %v189 = vpop.f32.mrb[0].mxu0
      %v190 = vadd.f32 0.0, %v189
      %v191 = vpop.f32.mrb[0].mxu0
      %v192 = vadd.f32 0.0, %v191
      %193 = vmatprep.mubr.f32.mxu0 0.0
      %194 = vmatmul.mubr.f32.gmra.mrb[0].mxu0 %v62
      %v195 = vpop.f32.mrb[0].mxu0
      %v196 = vadd.f32 0.0, %v195
      %v197 = vpop.f32.mrb[0].mxu0
      %v198 = vadd.f32 0.0, %v197
      %199 = vmatprep.mubr.f32.mxu0 0.0
      %200 = vmatmul.mubr.f32.gmra.mrb[0].mxu0 %v65
      %v201 = vpop.f32.mrb[0].mxu0
      %v202 = vadd.f32 0.0, %v201
      %v203 = vpop.f32.mrb[0].mxu0
      %v204 = vadd.f32 0.0, %v203
      %205 = vmatprep.mubr.f32.mxu0 0.0
      %206 = vmatmul.mubr.f32.gmra.mrb[0].mxu0 %v68
      %v207 = vpop.f32.mrb[0].mxu0
      %v208 = vadd.f32 0.0, %v207
      %v209 = vpop.f32.mrb[0].mxu0
      %v210 = vadd.f32 0.0, %v209
      %211 = vmatprep.mubr.f32.mxu0 0.0
      %212 = vmatmul.mubr.f32.gmra.mrb[0].mxu0 %v71
      %v213 = vpop.f32.mrb[0].mxu0
      %v214 = vadd.f32 0.0, %v213
      %v215 = vpop.f32.mrb[0].mxu0
      %v216 = vadd.f32 0.0, %v215
      %217 = vmatprep.mubr.f32.mxu0 0.0
      %218 = vmatmul.mubr.f32.gmra.mrb[0].mxu0 %v74
      %v219 = vpop.f32.mrb[0].mxu0
      %v220 = vadd.f32 0.0, %v219
      %v221 = vpop.f32.mrb[0].mxu0
      %v222 = vadd.f32 0.0, %v221
      %223 = vmatprep.mubr.f32.mxu0 0.0
      %224 = vmatmul.mubr.f32.gmra.mrb[0].mxu0 %v77
      %v225 = vpop.f32.mrb[0].mxu0
      %v226 = vadd.f32 0.0, %v225
      %v227 = vpop.f32.mrb[0].mxu0
      %v228 = vadd.f32 0.0, %v227
      %229 = vmatprep.mubr.f32.mxu0 0.0
      %230 = vmatmul.mubr.f32.gmra.mrb[0].mxu0 %v80
      %v231 = vpop.f32.mrb[0].mxu0
      %v232 = vadd.f32 0.0, %v231
      %v233 = vpop.f32.mrb[0].mxu0
      %v234 = vadd.f32 0.0, %v233
      %235 = vmatprep.mubr.f32.mxu0 0.0
      %236 = vmatmul.mubr.f32.gmra.mrb[0].mxu0 %v83
      %v237 = vpop.f32.mrb[0].mxu0
      %v238 = vadd.f32 0.0, %v237
      %v239 = vpop.f32.mrb[0].mxu0
      %v240 = vadd.f32 0.0, %v239
      %241 = vmatprep.mubr.f32.mxu0 0.0
      %242 = vmatmul.mubr.f32.gmra.mrb[0].mxu0 %v86
      %v243 = vpop.f32.mrb[0].mxu0
      %v244 = vadd.f32 0.0, %v243
      %v245 = vpop.f32.mrb[0].mxu0
      %v246 = vadd.f32 0.0, %v245
      %247 = vmatprep.mubr.f32.mxu0 0.0
      %248 = vmatmul.mubr.f32.gmra.mrb[0].mxu0 %v89
      %v249 = vpop.f32.mrb[0].mxu0
      %v250 = vadd.f32 0.0, %v249
      %v251 = vpop.f32.mrb[0].mxu0
      %v252 = vadd.f32 0.0, %v251
      %253 = vmatprep.mubr.f32.mxu0 0.0
      %254 = vmatmul.mubr.f32.gmra.mrb[0].mxu0 %v92
      %v255 = vpop.f32.mrb[0].mxu0
      %v256 = vadd.f32 0.0, %v255
      %v257 = vpop.f32.mrb[0].mxu0
      %v258 = vadd.f32 0.0, %v257
      %259 = vdwg.mxu0
      %v260 = vld [vmem:[%s1] sm:$0xff]
      %v261 = vld [vmem:[%s1 + $0x8] sm:$0xff]
      %v262 = vld [vmem:[%s1 + $0x10] sm:$0xff]
      %v263 = vld [vmem:[%s1 + $0x18] sm:$0xff]
      %v264 = vunpack.c.0.s8 %v260
      %v265 = vunpack.c.1.s8 %v260
      %v266 = vunpack.c.2.s8 %v260
      %v267 = vunpack.c.3.s8 %v260
      %v268 = vunpack.c.0.s8 %v261
      %v269 = vunpack.c.1.s8 %v261
      %v270 = vunpack.c.2.s8 %v261
      %v271 = vunpack.c.3.s8 %v261
      %v272 = vunpack.c.0.s8 %v262
      %v273 = vunpack.c.1.s8 %v262
      %v274 = vunpack.c.2.s8 %v262
      %v275 = vunpack.c.3.s8 %v262
      %v276 = vunpack.c.0.s8 %v263
      %v277 = vunpack.c.1.s8 %v263
      %v278 = vunpack.c.2.s8 %v263
      %v279 = vunpack.c.3.s8 %v263
      %v280 = vand.u32 %v264, 255
      %v281 = vand.u32 %v265, 255
      %v282 = vand.u32 %v266, 255
      %v283 = vand.u32 %v267, 255
      %v284 = vand.u32 %v268, 255
      %v285 = vand.u32 %v269, 255
      %v286 = vand.u32 %v270, 255
      %v287 = vand.u32 %v271, 255
      %v288 = vand.u32 %v272, 255
      %v289 = vand.u32 %v273, 255
      %v290 = vand.u32 %v274, 255
      %v291 = vand.u32 %v275, 255
      %v292 = vand.u32 %v276, 255
      %v293 = vand.u32 %v277, 255
      %v294 = vand.u32 %v278, 255
      %v295 = vand.u32 %v279, 255
      %v296 = vshra.s32 %v280, 4
      %v297 = vshra.s32 %v281, 4
      %v298 = vshra.s32 %v282, 4
      %v299 = vshra.s32 %v283, 4
      %v300 = vshra.s32 %v284, 4
      %v301 = vshra.s32 %v285, 4
      %v302 = vshra.s32 %v286, 4
      %v303 = vshra.s32 %v287, 4
      %v304 = vshra.s32 %v288, 4
      %v305 = vshra.s32 %v289, 4
      %v306 = vshra.s32 %v290, 4
      %v307 = vshra.s32 %v291, 4
      %v308 = vshra.s32 %v292, 4
      %v309 = vshra.s32 %v293, 4
      %v310 = vshra.s32 %v294, 4
      %v311 = vshra.s32 %v295, 4
      %v312 = vand.u32 %v296, 15
      %v313 = vand.u32 %v297, 15
      %v314 = vand.u32 %v298, 15
      %v315 = vand.u32 %v299, 15
      %v316 = vand.u32 %v300, 15
      %v317 = vand.u32 %v301, 15
      %v318 = vand.u32 %v302, 15
      %v319 = vand.u32 %v303, 15
      %v320 = vand.u32 %v304, 15
      %v321 = vand.u32 %v305, 15
      %v322 = vand.u32 %v306, 15
      %v323 = vand.u32 %v307, 15
      %v324 = vand.u32 %v308, 15
      %v325 = vand.u32 %v309, 15
      %v326 = vand.u32 %v310, 15
      %v327 = vand.u32 %v311, 15
      %v328 = vand.u32 %v280, 15
      %v329 = vand.u32 %v281, 15
      %v330 = vand.u32 %v282, 15
      %v331 = vand.u32 %v283, 15
      %v332 = vand.u32 %v284, 15
      %v333 = vand.u32 %v285, 15
      %v334 = vand.u32 %v286, 15
      %v335 = vand.u32 %v287, 15
      %v336 = vand.u32 %v288, 15
      %v337 = vand.u32 %v289, 15
      %v338 = vand.u32 %v290, 15
      %v339 = vand.u32 %v291, 15
      %v340 = vand.u32 %v292, 15
      %v341 = vand.u32 %v293, 15
      %v342 = vand.u32 %v294, 15
      %v343 = vand.u32 %v295, 15
      %v344 = vand.u32 %v312, 1
      %v345 = vand.u32 %v313, 1
      %v346 = vand.u32 %v314, 1
      %v347 = vand.u32 %v315, 1
      %v348 = vand.u32 %v316, 1
      %v349 = vand.u32 %v317, 1
      %v350 = vand.u32 %v318, 1
      %v351 = vand.u32 %v319, 1
      %v352 = vand.u32 %v320, 1
      %v353 = vand.u32 %v321, 1
      %v354 = vand.u32 %v322, 1
      %v355 = vand.u32 %v323, 1
      %v356 = vand.u32 %v324, 1
      %v357 = vand.u32 %v325, 1
      %v358 = vand.u32 %v326, 1
      %v359 = vand.u32 %v327, 1
      %vm360 = vcmp.ne.s32.totalorder %v344, 0
      %vm361 = vcmp.ne.s32.totalorder %v345, 0
      %vm362 = vcmp.ne.s32.totalorder %v346, 0
      %vm363 = vcmp.ne.s32.totalorder %v347, 0
      %vm364 = vcmp.ne.s32.totalorder %v348, 0
      %vm365 = vcmp.ne.s32.totalorder %v349, 0
      %vm366 = vcmp.ne.s32.totalorder %v350, 0
      %vm367 = vcmp.ne.s32.totalorder %v351, 0
      %vm368 = vcmp.ne.s32.totalorder %v352, 0
      %vm369 = vcmp.ne.s32.totalorder %v353, 0
      %vm370 = vcmp.ne.s32.totalorder %v354, 0
      %vm371 = vcmp.ne.s32.totalorder %v355, 0
      %vm372 = vcmp.ne.s32.totalorder %v356, 0
      %vm373 = vcmp.ne.s32.totalorder %v357, 0
      %vm374 = vcmp.ne.s32.totalorder %v358, 0
      %vm375 = vcmp.ne.s32.totalorder %v359, 0
      %v376 = vand.u32 %v312, 2
      %v377 = vand.u32 %v313, 2
      %v378 = vand.u32 %v314, 2
      %v379 = vand.u32 %v315, 2
      %v380 = vand.u32 %v316, 2
      %v381 = vand.u32 %v317, 2
      %v382 = vand.u32 %v318, 2
      %v383 = vand.u32 %v319, 2
      %v384 = vand.u32 %v320, 2
      %v385 = vand.u32 %v321, 2
      %v386 = vand.u32 %v322, 2
      %v387 = vand.u32 %v323, 2
      %v388 = vand.u32 %v324, 2
      %v389 = vand.u32 %v325, 2
      %v390 = vand.u32 %v326, 2
      %v391 = vand.u32 %v327, 2
      %vm392 = vcmp.ne.s32.totalorder %v376, 0
      %vm393 = vcmp.ne.s32.totalorder %v377, 0
      %vm394 = vcmp.ne.s32.totalorder %v378, 0
      %vm395 = vcmp.ne.s32.totalorder %v379, 0
      %vm396 = vcmp.ne.s32.totalorder %v380, 0
      %vm397 = vcmp.ne.s32.totalorder %v381, 0
      %vm398 = vcmp.ne.s32.totalorder %v382, 0
      %vm399 = vcmp.ne.s32.totalorder %v383, 0
      %vm400 = vcmp.ne.s32.totalorder %v384, 0
      %vm401 = vcmp.ne.s32.totalorder %v385, 0
      %vm402 = vcmp.ne.s32.totalorder %v386, 0
      %vm403 = vcmp.ne.s32.totalorder %v387, 0
      %vm404 = vcmp.ne.s32.totalorder %v388, 0
      %vm405 = vcmp.ne.s32.totalorder %v389, 0
      %vm406 = vcmp.ne.s32.totalorder %v390, 0
      %vm407 = vcmp.ne.s32.totalorder %v391, 0
      %v408 = vand.u32 %v312, 4
      %v409 = vand.u32 %v313, 4
      %v410 = vand.u32 %v314, 4
      %v411 = vand.u32 %v315, 4
      %v412 = vand.u32 %v316, 4
      %v413 = vand.u32 %v317, 4
      %v414 = vand.u32 %v318, 4
      %v415 = vand.u32 %v319, 4
      %v416 = vand.u32 %v320, 4
      %v417 = vand.u32 %v321, 4
      %v418 = vand.u32 %v322, 4
      %v419 = vand.u32 %v323, 4
      %v420 = vand.u32 %v324, 4
      %v421 = vand.u32 %v325, 4
      %v422 = vand.u32 %v326, 4
      %v423 = vand.u32 %v327, 4
      %vm424 = vcmp.ne.s32.totalorder %v408, 0
      %vm425 = vcmp.ne.s32.totalorder %v409, 0
      %vm426 = vcmp.ne.s32.totalorder %v410, 0
      %vm427 = vcmp.ne.s32.totalorder %v411, 0
      %vm428 = vcmp.ne.s32.totalorder %v412, 0
      %vm429 = vcmp.ne.s32.totalorder %v413, 0
      %vm430 = vcmp.ne.s32.totalorder %v414, 0
      %vm431 = vcmp.ne.s32.totalorder %v415, 0
      %vm432 = vcmp.ne.s32.totalorder %v416, 0
      %vm433 = vcmp.ne.s32.totalorder %v417, 0
      %vm434 = vcmp.ne.s32.totalorder %v418, 0
      %vm435 = vcmp.ne.s32.totalorder %v419, 0
      %vm436 = vcmp.ne.s32.totalorder %v420, 0
      %vm437 = vcmp.ne.s32.totalorder %v421, 0
      %vm438 = vcmp.ne.s32.totalorder %v422, 0
      %vm439 = vcmp.ne.s32.totalorder %v423, 0
      %v440 = vand.u32 %v312, 8
      %v441 = vand.u32 %v313, 8
      %v442 = vand.u32 %v314, 8
      %v443 = vand.u32 %v315, 8
      %v444 = vand.u32 %v316, 8
      %v445 = vand.u32 %v317, 8
      %v446 = vand.u32 %v318, 8
      %v447 = vand.u32 %v319, 8
      %v448 = vand.u32 %v320, 8
      %v449 = vand.u32 %v321, 8
      %v450 = vand.u32 %v322, 8
      %v451 = vand.u32 %v323, 8
      %v452 = vand.u32 %v324, 8
      %v453 = vand.u32 %v325, 8
      %v454 = vand.u32 %v326, 8
      %v455 = vand.u32 %v327, 8
      %vm456 = vcmp.ne.s32.totalorder %v440, 0
      %vm457 = vcmp.ne.s32.totalorder %v441, 0
      %vm458 = vcmp.ne.s32.totalorder %v442, 0
      %vm459 = vcmp.ne.s32.totalorder %v443, 0
      %vm460 = vcmp.ne.s32.totalorder %v444, 0
      %vm461 = vcmp.ne.s32.totalorder %v445, 0
      %vm462 = vcmp.ne.s32.totalorder %v446, 0
      %vm463 = vcmp.ne.s32.totalorder %v447, 0
      %vm464 = vcmp.ne.s32.totalorder %v448, 0
      %vm465 = vcmp.ne.s32.totalorder %v449, 0
      %vm466 = vcmp.ne.s32.totalorder %v450, 0
      %vm467 = vcmp.ne.s32.totalorder %v451, 0
      %vm468 = vcmp.ne.s32.totalorder %v452, 0
      %vm469 = vcmp.ne.s32.totalorder %v453, 0
      %vm470 = vcmp.ne.s32.totalorder %v454, 0
      %vm471 = vcmp.ne.s32.totalorder %v455, 0
      %v472 = vsel %vm360, -0.3949175, -0.52507305
      %v473 = vsel %vm361, -0.3949175, -0.52507305
      %v474 = vsel %vm362, -0.3949175, -0.52507305
      %v475 = vsel %vm363, -0.3949175, -0.52507305
      %v476 = vsel %vm364, -0.3949175, -0.52507305
      %v477 = vsel %vm365, -0.3949175, -0.52507305
      %v478 = vsel %vm366, -0.3949175, -0.52507305
      %v479 = vsel %vm367, -0.3949175, -0.52507305
      %v480 = vsel %vm368, -0.3949175, -0.52507305
      %v481 = vsel %vm369, -0.3949175, -0.52507305
      %v482 = vsel %vm370, -0.3949175, -0.52507305
      %v483 = vsel %vm371, -0.3949175, -0.52507305
      %v484 = vsel %vm372, -0.3949175, -0.52507305
      %v485 = vsel %vm373, -0.3949175, -0.52507305
      %v486 = vsel %vm374, -0.3949175, -0.52507305
      %v487 = vsel %vm375, -0.3949175, -0.52507305
      %v488 = vsel %vm360, -0.6961928, -1.0
      %v489 = vsel %vm361, -0.6961928, -1.0
      %v490 = vsel %vm362, -0.6961928, -1.0
      %v491 = vsel %vm363, -0.6961928, -1.0
      %v492 = vsel %vm364, -0.6961928, -1.0
      %v493 = vsel %vm365, -0.6961928, -1.0
      %v494 = vsel %vm366, -0.6961928, -1.0
      %v495 = vsel %vm367, -0.6961928, -1.0
      %v496 = vsel %vm368, -0.6961928, -1.0
      %v497 = vsel %vm369, -0.6961928, -1.0
      %v498 = vsel %vm370, -0.6961928, -1.0
      %v499 = vsel %vm371, -0.6961928, -1.0
      %v500 = vsel %vm372, -0.6961928, -1.0
      %v501 = vsel %vm373, -0.6961928, -1.0
      %v502 = vsel %vm374, -0.6961928, -1.0
      %v503 = vsel %vm375, -0.6961928, -1.0
      %v504 = vsel %vm392, %v472, %v488
      %v505 = vsel %vm393, %v473, %v489
      %v506 = vsel %vm394, %v474, %v490
      %v507 = vsel %vm395, %v475, %v491
      %v508 = vsel %vm396, %v476, %v492
      %v509 = vsel %vm397, %v477, %v493
      %v510 = vsel %vm398, %v478, %v494
      %v511 = vsel %vm399, %v479, %v495
      %v512 = vsel %vm400, %v480, %v496
      %v513 = vsel %vm401, %v481, %v497
      %v514 = vsel %vm402, %v482, %v498
      %v515 = vsel %vm403, %v483, %v499
      %v516 = vsel %vm404, %v484, %v500
      %v517 = vsel %vm405, %v485, %v501
      %v518 = vsel %vm406, %v486, %v502
      %v519 = vsel %vm407, %v487, %v503
      %v520 = vsel %vm360, 0.0, -0.091050036
      %v521 = vsel %vm361, 0.0, -0.091050036
      %v522 = vsel %vm362, 0.0, -0.091050036
      %v523 = vsel %vm363, 0.0, -0.091050036
      %v524 = vsel %vm364, 0.0, -0.091050036
      %v525 = vsel %vm365, 0.0, -0.091050036
      %v526 = vsel %vm366, 0.0, -0.091050036
      %v527 = vsel %vm367, 0.0, -0.091050036
      %v528 = vsel %vm368, 0.0, -0.091050036
      %v529 = vsel %vm369, 0.0, -0.091050036
      %v530 = vsel %vm370, 0.0, -0.091050036
      %v531 = vsel %vm371, 0.0, -0.091050036
      %v532 = vsel %vm372, 0.0, -0.091050036
      %v533 = vsel %vm373, 0.0, -0.091050036
      %v534 = vsel %vm374, 0.0, -0.091050036
      %v535 = vsel %vm375, 0.0, -0.091050036
      %v536 = vsel %vm360, -0.18477343, -0.28444138
      %v537 = vsel %vm361, -0.18477343, -0.28444138
      %v538 = vsel %vm362, -0.18477343, -0.28444138
      %v539 = vsel %vm363, -0.18477343, -0.28444138
      %v540 = vsel %vm364, -0.18477343, -0.28444138
      %v541 = vsel %vm365, -0.18477343, -0.28444138
      %v542 = vsel %vm366, -0.18477343, -0.28444138
      %v543 = vsel %vm367, -0.18477343, -0.28444138
      %v544 = vsel %vm368, -0.18477343, -0.28444138
      %v545 = vsel %vm369, -0.18477343, -0.28444138
      %v546 = vsel %vm370, -0.18477343, -0.28444138
      %v547 = vsel %vm371, -0.18477343, -0.28444138
      %v548 = vsel %vm372, -0.18477343, -0.28444138
      %v549 = vsel %vm373, -0.18477343, -0.28444138
      %v550 = vsel %vm374, -0.18477343, -0.28444138
      %v551 = vsel %vm375, -0.18477343, -0.28444138
      %v552 = vsel %vm392, %v520, %v536
      %v553 = vsel %vm393, %v521, %v537
      %v554 = vsel %vm394, %v522, %v538
      %v555 = vsel %vm395, %v523, %v539
      %v556 = vsel %vm396, %v524, %v540
      %v557 = vsel %vm397, %v525, %v541
      %v558 = vsel %vm398, %v526, %v542
      %v559 = vsel %vm399, %v527, %v543
      %v560 = vsel %vm400, %v528, %v544
      %v561 = vsel %vm401, %v529, %v545
      %v562 = vsel %vm402, %v530, %v546
      %v563 = vsel %vm403, %v531, %v547
      %v564 = vsel %vm404, %v532, %v548
      %v565 = vsel %vm405, %v533, %v549
      %v566 = vsel %vm406, %v534, %v550
      %v567 = vsel %vm407, %v535, %v551
      %v568 = vsel %vm360, 0.33791524, 0.2461123
      %v569 = vsel %vm361, 0.33791524, 0.2461123
      %v570 = vsel %vm362, 0.33791524, 0.2461123
      %v571 = vsel %vm363, 0.33791524, 0.2461123
      %v572 = vsel %vm364, 0.33791524, 0.2461123
      %v573 = vsel %vm365, 0.33791524, 0.2461123
      %v574 = vsel %vm366, 0.33791524, 0.2461123
      %v575 = vsel %vm367, 0.33791524, 0.2461123
      %v576 = vsel %vm368, 0.33791524, 0.2461123
      %v577 = vsel %vm369, 0.33791524, 0.2461123
      %v578 = vsel %vm370, 0.33791524, 0.2461123
      %v579 = vsel %vm371, 0.33791524, 0.2461123
      %v580 = vsel %vm372, 0.33791524, 0.2461123
      %v581 = vsel %vm373, 0.33791524, 0.2461123
      %v582 = vsel %vm374, 0.33791524, 0.2461123
      %v583 = vsel %vm375, 0.33791524, 0.2461123
      %v584 = vsel %vm360, 0.1609302, 0.0795803
      %v585 = vsel %vm361, 0.1609302, 0.0795803
      %v586 = vsel %vm362, 0.1609302, 0.0795803
      %v587 = vsel %vm363, 0.1609302, 0.0795803
      %v588 = vsel %vm364, 0.1609302, 0.0795803
      %v589 = vsel %vm365, 0.1609302, 0.0795803
      %v590 = vsel %vm366, 0.1609302, 0.0795803
      %v591 = vsel %vm367, 0.1609302, 0.0795803
      %v592 = vsel %vm368, 0.1609302, 0.0795803
      %v593 = vsel %vm369, 0.1609302, 0.0795803
      %v594 = vsel %vm370, 0.1609302, 0.0795803
      %v595 = vsel %vm371, 0.1609302, 0.0795803
      %v596 = vsel %vm372, 0.1609302, 0.0795803
      %v597 = vsel %vm373, 0.1609302, 0.0795803
      %v598 = vsel %vm374, 0.1609302, 0.0795803
      %v599 = vsel %vm375, 0.1609302, 0.0795803
      %v600 = vsel %vm392, %v568, %v584
      %v601 = vsel %vm393, %v569, %v585
      %v602 = vsel %vm394, %v570, %v586
      %v603 = vsel %vm395, %v571, %v587
      %v604 = vsel %vm396, %v572, %v588
      %v605 = vsel %vm397, %v573, %v589
      %v606 = vsel %vm398, %v574, %v590
      %v607 = vsel %vm399, %v575, %v591
      %v608 = vsel %vm400, %v576, %v592
      %v609 = vsel %vm401, %v577, %v593
      %v610 = vsel %vm402, %v578, %v594
      %v611 = vsel %vm403, %v579, %v595
      %v612 = vsel %vm404, %v580, %v596
      %v613 = vsel %vm405, %v581, %v597
      %v614 = vsel %vm406, %v582, %v598
      %v615 = vsel %vm407, %v583, %v599
      %v616 = vsel %vm360, 1.0, 0.72295684
      %v617 = vsel %vm361, 1.0, 0.72295684
      %v618 = vsel %vm362, 1.0, 0.72295684
      %v619 = vsel %vm363, 1.0, 0.72295684
      %v620 = vsel %vm364, 1.0, 0.72295684
      %v621 = vsel %vm365, 1.0, 0.72295684
      %v622 = vsel %vm366, 1.0, 0.72295684
      %v623 = vsel %vm367, 1.0, 0.72295684
      %v624 = vsel %vm368, 1.0, 0.72295684
      %v625 = vsel %vm369, 1.0, 0.72295684
      %v626 = vsel %vm370, 1.0, 0.72295684
      %v627 = vsel %vm371, 1.0, 0.72295684
      %v628 = vsel %vm372, 1.0, 0.72295684
      %v629 = vsel %vm373, 1.0, 0.72295684
      %v630 = vsel %vm374, 1.0, 0.72295684
      %v631 = vsel %vm375, 1.0, 0.72295684
      %v632 = vsel %vm360, 0.562617, 0.44070983
      %v633 = vsel %vm361, 0.562617, 0.44070983
      %v634 = vsel %vm362, 0.562617, 0.44070983
      %v635 = vsel %vm363, 0.562617, 0.44070983
      %v636 = vsel %vm364, 0.562617, 0.44070983
      %v637 = vsel %vm365, 0.562617, 0.44070983
      %v638 = vsel %vm366, 0.562617, 0.44070983
      %v639 = vsel %vm367, 0.562617, 0.44070983
      %v640 = vsel %vm368, 0.562617, 0.44070983
      %v641 = vsel %vm369, 0.562617, 0.44070983
      %v642 = vsel %vm370, 0.562617, 0.44070983
      %v643 = vsel %vm371, 0.562617, 0.44070983
      %v644 = vsel %vm372, 0.562617, 0.44070983
      %v645 = vsel %vm373, 0.562617, 0.44070983
      %v646 = vsel %vm374, 0.562617, 0.44070983
      %v647 = vsel %vm375, 0.562617, 0.44070983
      %v648 = vsel %vm392, %v616, %v632
      %v649 = vsel %vm393, %v617, %v633
      %v650 = vsel %vm394, %v618, %v634
      %v651 = vsel %vm395, %v619, %v635
      %v652 = vsel %vm396, %v620, %v636
      %v653 = vsel %vm397, %v621, %v637
      %v654 = vsel %vm398, %v622, %v638
      %v655 = vsel %vm399, %v623, %v639
      %v656 = vsel %vm400, %v624, %v640
      %v657 = vsel %vm401, %v625, %v641
      %v658 = vsel %vm402, %v626, %v642
      %v659 = vsel %vm403, %v627, %v643
      %v660 = vsel %vm404, %v628, %v644
      %v661 = vsel %vm405, %v629, %v645
      %v662 = vsel %vm406, %v630, %v646
      %v663 = vsel %vm407, %v631, %v647
      %v664 = vsel %vm424, %v552, %v504
      %v665 = vsel %vm425, %v553, %v505
      %v666 = vsel %vm426, %v554, %v506
      %v667 = vsel %vm427, %v555, %v507
      %v668 = vsel %vm428, %v556, %v508
      %v669 = vsel %vm429, %v557, %v509
      %v670 = vsel %vm430, %v558, %v510
      %v671 = vsel %vm431, %v559, %v511
      %v672 = vsel %vm432, %v560, %v512
      %v673 = vsel %vm433, %v561, %v513
      %v674 = vsel %vm434, %v562, %v514
      %v675 = vsel %vm435, %v563, %v515
      %v676 = vsel %vm436, %v564, %v516
      %v677 = vsel %vm437, %v565, %v517
      %v678 = vsel %vm438, %v566, %v518
      %v679 = vsel %vm439, %v567, %v519
      %v680 = vsel %vm424, %v648, %v600
      %v681 = vsel %vm425, %v649, %v601
      %v682 = vsel %vm426, %v650, %v602
      %v683 = vsel %vm427, %v651, %v603
      %v684 = vsel %vm428, %v652, %v604
      %v685 = vsel %vm429, %v653, %v605
      %v686 = vsel %vm430, %v654, %v606
      %v687 = vsel %vm431, %v655, %v607
      %v688 = vsel %vm432, %v656, %v608
      %v689 = vsel %vm433, %v657, %v609
      %v690 = vsel %vm434, %v658, %v610
      %v691 = vsel %vm435, %v659, %v611
      %v692 = vsel %vm436, %v660, %v612
      %v693 = vsel %vm437, %v661, %v613
      %v694 = vsel %vm438, %v662, %v614
      %v695 = vsel %vm439, %v663, %v615
      %v696 = vsel %vm456, %v680, %v664
      %v697 = vsel %vm457, %v681, %v665
      %v698 = vsel %vm458, %v682, %v666
      %v699 = vsel %vm459, %v683, %v667
      %v700 = vsel %vm460, %v684, %v668
      %v701 = vsel %vm461, %v685, %v669
      %v702 = vsel %vm462, %v686, %v670
      %v703 = vsel %vm463, %v687, %v671
      %v704 = vsel %vm464, %v688, %v672
      %v705 = vsel %vm465, %v689, %v673
      %v706 = vsel %vm466, %v690, %v674
      %v707 = vsel %vm467, %v691, %v675
      %v708 = vsel %vm468, %v692, %v676
      %v709 = vsel %vm469, %v693, %v677
      %v710 = vsel %vm470, %v694, %v678
      %v711 = vsel %vm471, %v695, %v679
      %v712 = vand.u32 %v328, 1
      %v713 = vand.u32 %v329, 1
      %v714 = vand.u32 %v330, 1
      %v715 = vand.u32 %v331, 1
      %v716 = vand.u32 %v332, 1
      %v717 = vand.u32 %v333, 1
      %v718 = vand.u32 %v334, 1
      %v719 = vand.u32 %v335, 1
      %v720 = vand.u32 %v336, 1
      %v721 = vand.u32 %v337, 1
      %v722 = vand.u32 %v338, 1
      %v723 = vand.u32 %v339, 1
      %v724 = vand.u32 %v340, 1
      %v725 = vand.u32 %v341, 1
      %v726 = vand.u32 %v342, 1
      %v727 = vand.u32 %v343, 1
      %vm728 = vcmp.ne.s32.totalorder %v712, 0
      %vm729 = vcmp.ne.s32.totalorder %v713, 0
      %vm730 = vcmp.ne.s32.totalorder %v714, 0
      %vm731 = vcmp.ne.s32.totalorder %v715, 0
      %vm732 = vcmp.ne.s32.totalorder %v716, 0
      %vm733 = vcmp.ne.s32.totalorder %v717, 0
      %vm734 = vcmp.ne.s32.totalorder %v718, 0
      %vm735 = vcmp.ne.s32.totalorder %v719, 0
      %vm736 = vcmp.ne.s32.totalorder %v720, 0
      %vm737 = vcmp.ne.s32.totalorder %v721, 0
      %vm738 = vcmp.ne.s32.totalorder %v722, 0
      %vm739 = vcmp.ne.s32.totalorder %v723, 0
      %vm740 = vcmp.ne.s32.totalorder %v724, 0
      %vm741 = vcmp.ne.s32.totalorder %v725, 0
      %vm742 = vcmp.ne.s32.totalorder %v726, 0
      %vm743 = vcmp.ne.s32.totalorder %v727, 0
      %v744 = vand.u32 %v328, 2
      %v745 = vand.u32 %v329, 2
      %v746 = vand.u32 %v330, 2
      %v747 = vand.u32 %v331, 2
      %v748 = vand.u32 %v332, 2
      %v749 = vand.u32 %v333, 2
      %v750 = vand.u32 %v334, 2
      %v751 = vand.u32 %v335, 2
      %v752 = vand.u32 %v336, 2
      %v753 = vand.u32 %v337, 2
      %v754 = vand.u32 %v338, 2
      %v755 = vand.u32 %v339, 2
      %v756 = vand.u32 %v340, 2
      %v757 = vand.u32 %v341, 2
      %v758 = vand.u32 %v342, 2
      %v759 = vand.u32 %v343, 2
      %vm760 = vcmp.ne.s32.totalorder %v744, 0
      %vm761 = vcmp.ne.s32.totalorder %v745, 0
      %vm762 = vcmp.ne.s32.totalorder %v746, 0
      %vm763 = vcmp.ne.s32.totalorder %v747, 0
      %vm764 = vcmp.ne.s32.totalorder %v748, 0
      %vm765 = vcmp.ne.s32.totalorder %v749, 0
      %vm766 = vcmp.ne.s32.totalorder %v750, 0
      %vm767 = vcmp.ne.s32.totalorder %v751, 0
      %vm768 = vcmp.ne.s32.totalorder %v752, 0
      %vm769 = vcmp.ne.s32.totalorder %v753, 0
      %vm770 = vcmp.ne.s32.totalorder %v754, 0
      %vm771 = vcmp.ne.s32.totalorder %v755, 0
      %vm772 = vcmp.ne.s32.totalorder %v756, 0
      %vm773 = vcmp.ne.s32.totalorder %v757, 0
      %vm774 = vcmp.ne.s32.totalorder %v758, 0
      %vm775 = vcmp.ne.s32.totalorder %v759, 0
      %v776 = vand.u32 %v328, 4
      %v777 = vand.u32 %v329, 4
      %v778 = vand.u32 %v330, 4
      %v779 = vand.u32 %v331, 4
      %v780 = vand.u32 %v332, 4
      %v781 = vand.u32 %v333, 4
      %v782 = vand.u32 %v334, 4
      %v783 = vand.u32 %v335, 4
      %v784 = vand.u32 %v336, 4
      %v785 = vand.u32 %v337, 4
      %v786 = vand.u32 %v338, 4
      %v787 = vand.u32 %v339, 4
      %v788 = vand.u32 %v340, 4
      %v789 = vand.u32 %v341, 4
      %v790 = vand.u32 %v342, 4
      %v791 = vand.u32 %v343, 4
      %vm792 = vcmp.ne.s32.totalorder %v776, 0
      %vm793 = vcmp.ne.s32.totalorder %v777, 0
      %vm794 = vcmp.ne.s32.totalorder %v778, 0
      %vm795 = vcmp.ne.s32.totalorder %v779, 0
      %vm796 = vcmp.ne.s32.totalorder %v780, 0
      %vm797 = vcmp.ne.s32.totalorder %v781, 0
      %vm798 = vcmp.ne.s32.totalorder %v782, 0
      %vm799 = vcmp.ne.s32.totalorder %v783, 0
      %vm800 = vcmp.ne.s32.totalorder %v784, 0
      %vm801 = vcmp.ne.s32.totalorder %v785, 0
      %vm802 = vcmp.ne.s32.totalorder %v786, 0
      %vm803 = vcmp.ne.s32.totalorder %v787, 0
      %vm804 = vcmp.ne.s32.totalorder %v788, 0
      %vm805 = vcmp.ne.s32.totalorder %v789, 0
      %vm806 = vcmp.ne.s32.totalorder %v790, 0
      %vm807 = vcmp.ne.s32.totalorder %v791, 0
      %v808 = vand.u32 %v328, 8
      %v809 = vand.u32 %v329, 8
      %v810 = vand.u32 %v330, 8
      %v811 = vand.u32 %v331, 8
      %v812 = vand.u32 %v332, 8
      %v813 = vand.u32 %v333, 8
      %v814 = vand.u32 %v334, 8
      %v815 = vand.u32 %v335, 8
      %v816 = vand.u32 %v336, 8
      %v817 = vand.u32 %v337, 8
      %v818 = vand.u32 %v338, 8
      %v819 = vand.u32 %v339, 8
      %v820 = vand.u32 %v340, 8
      %v821 = vand.u32 %v341, 8
      %v822 = vand.u32 %v342, 8
      %v823 = vand.u32 %v343, 8
      %vm824 = vcmp.ne.s32.totalorder %v808, 0
      %vm825 = vcmp.ne.s32.totalorder %v809, 0
      %vm826 = vcmp.ne.s32.totalorder %v810, 0
      %vm827 = vcmp.ne.s32.totalorder %v811, 0
      %vm828 = vcmp.ne.s32.totalorder %v812, 0
      %vm829 = vcmp.ne.s32.totalorder %v813, 0
      %vm830 = vcmp.ne.s32.totalorder %v814, 0
      %vm831 = vcmp.ne.s32.totalorder %v815, 0
      %vm832 = vcmp.ne.s32.totalorder %v816, 0
      %vm833 = vcmp.ne.s32.totalorder %v817, 0
      %vm834 = vcmp.ne.s32.totalorder %v818, 0
      %vm835 = vcmp.ne.s32.totalorder %v819, 0
      %vm836 = vcmp.ne.s32.totalorder %v820, 0
      %vm837 = vcmp.ne.s32.totalorder %v821, 0
      %vm838 = vcmp.ne.s32.totalorder %v822, 0
      %vm839 = vcmp.ne.s32.totalorder %v823, 0
      %v840 = vsel %vm728, -0.3949175, -0.52507305
      %v841 = vsel %vm729, -0.3949175, -0.52507305
      %v842 = vsel %vm730, -0.3949175, -0.52507305
      %v843 = vsel %vm731, -0.3949175, -0.52507305
      %v844 = vsel %vm732, -0.3949175, -0.52507305
      %v845 = vsel %vm733, -0.3949175, -0.52507305
      %v846 = vsel %vm734, -0.3949175, -0.52507305
      %v847 = vsel %vm735, -0.3949175, -0.52507305
      %v848 = vsel %vm736, -0.3949175, -0.52507305
      %v849 = vsel %vm737, -0.3949175, -0.52507305
      %v850 = vsel %vm738, -0.3949175, -0.52507305
      %v851 = vsel %vm739, -0.3949175, -0.52507305
      %v852 = vsel %vm740, -0.3949175, -0.52507305
      %v853 = vsel %vm741, -0.3949175, -0.52507305
      %v854 = vsel %vm742, -0.3949175, -0.52507305
      %v855 = vsel %vm743, -0.3949175, -0.52507305
      %v856 = vsel %vm728, -0.6961928, -1.0
      %v857 = vsel %vm729, -0.6961928, -1.0
      %v858 = vsel %vm730, -0.6961928, -1.0
      %v859 = vsel %vm731, -0.6961928, -1.0
      %v860 = vsel %vm732, -0.6961928, -1.0
      %v861 = vsel %vm733, -0.6961928, -1.0
      %v862 = vsel %vm734, -0.6961928, -1.0
      %v863 = vsel %vm735, -0.6961928, -1.0
      %v864 = vsel %vm736, -0.6961928, -1.0
      %v865 = vsel %vm737, -0.6961928, -1.0
      %v866 = vsel %vm738, -0.6961928, -1.0
      %v867 = vsel %vm739, -0.6961928, -1.0
      %v868 = vsel %vm740, -0.6961928, -1.0
      %v869 = vsel %vm741, -0.6961928, -1.0
      %v870 = vsel %vm742, -0.6961928, -1.0
      %v871 = vsel %vm743, -0.6961928, -1.0
      %v872 = vsel %vm760, %v840, %v856
      %v873 = vsel %vm761, %v841, %v857
      %v874 = vsel %vm762, %v842, %v858
      %v875 = vsel %vm763, %v843, %v859
      %v876 = vsel %vm764, %v844, %v860
      %v877 = vsel %vm765, %v845, %v861
      %v878 = vsel %vm766, %v846, %v862
      %v879 = vsel %vm767, %v847, %v863
      %v880 = vsel %vm768, %v848, %v864
      %v881 = vsel %vm769, %v849, %v865
      %v882 = vsel %vm770, %v850, %v866
      %v883 = vsel %vm771, %v851, %v867
      %v884 = vsel %vm772, %v852, %v868
      %v885 = vsel %vm773, %v853, %v869
      %v886 = vsel %vm774, %v854, %v870
      %v887 = vsel %vm775, %v855, %v871
      %v888 = vsel %vm728, 0.0, -0.091050036
      %v889 = vsel %vm729, 0.0, -0.091050036
      %v890 = vsel %vm730, 0.0, -0.091050036
      %v891 = vsel %vm731, 0.0, -0.091050036
      %v892 = vsel %vm732, 0.0, -0.091050036
      %v893 = vsel %vm733, 0.0, -0.091050036
      %v894 = vsel %vm734, 0.0, -0.091050036
      %v895 = vsel %vm735, 0.0, -0.091050036
      %v896 = vsel %vm736, 0.0, -0.091050036
      %v897 = vsel %vm737, 0.0, -0.091050036
      %v898 = vsel %vm738, 0.0, -0.091050036
      %v899 = vsel %vm739, 0.0, -0.091050036
      %v900 = vsel %vm740, 0.0, -0.091050036
      %v901 = vsel %vm741, 0.0, -0.091050036
      %v902 = vsel %vm742, 0.0, -0.091050036
      %v903 = vsel %vm743, 0.0, -0.091050036
      %v904 = vsel %vm728, -0.18477343, -0.28444138
      %v905 = vsel %vm729, -0.18477343, -0.28444138
      %v906 = vsel %vm730, -0.18477343, -0.28444138
      %v907 = vsel %vm731, -0.18477343, -0.28444138
      %v908 = vsel %vm732, -0.18477343, -0.28444138
      %v909 = vsel %vm733, -0.18477343, -0.28444138
      %v910 = vsel %vm734, -0.18477343, -0.28444138
      %v911 = vsel %vm735, -0.18477343, -0.28444138
      %v912 = vsel %vm736, -0.18477343, -0.28444138
      %v913 = vsel %vm737, -0.18477343, -0.28444138
      %v914 = vsel %vm738, -0.18477343, -0.28444138
      %v915 = vsel %vm739, -0.18477343, -0.28444138
      %v916 = vsel %vm740, -0.18477343, -0.28444138
      %v917 = vsel %vm741, -0.18477343, -0.28444138
      %v918 = vsel %vm742, -0.18477343, -0.28444138
      %v919 = vsel %vm743, -0.18477343, -0.28444138
      %v920 = vsel %vm760, %v888, %v904
      %v921 = vsel %vm761, %v889, %v905
      %v922 = vsel %vm762, %v890, %v906
      %v923 = vsel %vm763, %v891, %v907
      %v924 = vsel %vm764, %v892, %v908
      %v925 = vsel %vm765, %v893, %v909
      %v926 = vsel %vm766, %v894, %v910
      %v927 = vsel %vm767, %v895, %v911
      %v928 = vsel %vm768, %v896, %v912
      %v929 = vsel %vm769, %v897, %v913
      %v930 = vsel %vm770, %v898, %v914
      %v931 = vsel %vm771, %v899, %v915
      %v932 = vsel %vm772, %v900, %v916
      %v933 = vsel %vm773, %v901, %v917
      %v934 = vsel %vm774, %v902, %v918
      %v935 = vsel %vm775, %v903, %v919
      %v936 = vsel %vm728, 0.33791524, 0.2461123
      %v937 = vsel %vm729, 0.33791524, 0.2461123
      %v938 = vsel %vm730, 0.33791524, 0.2461123
      %v939 = vsel %vm731, 0.33791524, 0.2461123
      %v940 = vsel %vm732, 0.33791524, 0.2461123
      %v941 = vsel %vm733, 0.33791524, 0.2461123
      %v942 = vsel %vm734, 0.33791524, 0.2461123
      %v943 = vsel %vm735, 0.33791524, 0.2461123
      %v944 = vsel %vm736, 0.33791524, 0.2461123
      %v945 = vsel %vm737, 0.33791524, 0.2461123
      %v946 = vsel %vm738, 0.33791524, 0.2461123
      %v947 = vsel %vm739, 0.33791524, 0.2461123
      %v948 = vsel %vm740, 0.33791524, 0.2461123
      %v949 = vsel %vm741, 0.33791524, 0.2461123
      %v950 = vsel %vm742, 0.33791524, 0.2461123
      %v951 = vsel %vm743, 0.33791524, 0.2461123
      %v952 = vsel %vm728, 0.1609302, 0.0795803
      %v953 = vsel %vm729, 0.1609302, 0.0795803
      %v954 = vsel %vm730, 0.1609302, 0.0795803
      %v955 = vsel %vm731, 0.1609302, 0.0795803
      %v956 = vsel %vm732, 0.1609302, 0.0795803
      %v957 = vsel %vm733, 0.1609302, 0.0795803
      %v958 = vsel %vm734, 0.1609302, 0.0795803
      %v959 = vsel %vm735, 0.1609302, 0.0795803
      %v960 = vsel %vm736, 0.1609302, 0.0795803
      %v961 = vsel %vm737, 0.1609302, 0.0795803
      %v962 = vsel %vm738, 0.1609302, 0.0795803
      %v963 = vsel %vm739, 0.1609302, 0.0795803
      %v964 = vsel %vm740, 0.1609302, 0.0795803
      %v965 = vsel %vm741, 0.1609302, 0.0795803
      %v966 = vsel %vm742, 0.1609302, 0.0795803
      %v967 = vsel %vm743, 0.1609302, 0.0795803
      %v968 = vsel %vm760, %v936, %v952
      %v969 = vsel %vm761, %v937, %v953
      %v970 = vsel %vm762, %v938, %v954
      %v971 = vsel %vm763, %v939, %v955
      %v972 = vsel %vm764, %v940, %v956
      %v973 = vsel %vm765, %v941, %v957
      %v974 = vsel %vm766, %v942, %v958
      %v975 = vsel %vm767, %v943, %v959
      %v976 = vsel %vm768, %v944, %v960
      %v977 = vsel %vm769, %v945, %v961
      %v978 = vsel %vm770, %v946, %v962
      %v979 = vsel %vm771, %v947, %v963
      %v980 = vsel %vm772, %v948, %v964
      %v981 = vsel %vm773, %v949, %v965
      %v982 = vsel %vm774, %v950, %v966
      %v983 = vsel %vm775, %v951, %v967
      %v984 = vsel %vm728, 1.0, 0.72295684
      %v985 = vsel %vm729, 1.0, 0.72295684
      %v986 = vsel %vm730, 1.0, 0.72295684
      %v987 = vsel %vm731, 1.0, 0.72295684
      %v988 = vsel %vm732, 1.0, 0.72295684
      %v989 = vsel %vm733, 1.0, 0.72295684
      %v990 = vsel %vm734, 1.0, 0.72295684
      %v991 = vsel %vm735, 1.0, 0.72295684
      %v992 = vsel %vm736, 1.0, 0.72295684
      %v993 = vsel %vm737, 1.0, 0.72295684
      %v994 = vsel %vm738, 1.0, 0.72295684
      %v995 = vsel %vm739, 1.0, 0.72295684
      %v996 = vsel %vm740, 1.0, 0.72295684
      %v997 = vsel %vm741, 1.0, 0.72295684
      %v998 = vsel %vm742, 1.0, 0.72295684
      %v999 = vsel %vm743, 1.0, 0.72295684
      %v1000 = vsel %vm728, 0.562617, 0.44070983
      %v1001 = vsel %vm729, 0.562617, 0.44070983
      %v1002 = vsel %vm730, 0.562617, 0.44070983
      %v1003 = vsel %vm731, 0.562617, 0.44070983
      %v1004 = vsel %vm732, 0.562617, 0.44070983
      %v1005 = vsel %vm733, 0.562617, 0.44070983
      %v1006 = vsel %vm734, 0.562617, 0.44070983
      %v1007 = vsel %vm735, 0.562617, 0.44070983
      %v1008 = vsel %vm736, 0.562617, 0.44070983
      %v1009 = vsel %vm737, 0.562617, 0.44070983
      %v1010 = vsel %vm738, 0.562617, 0.44070983
      %v1011 = vsel %vm739, 0.562617, 0.44070983
      %v1012 = vsel %vm740, 0.562617, 0.44070983
      %v1013 = vsel %vm741, 0.562617, 0.44070983
      %v1014 = vsel %vm742, 0.562617, 0.44070983
      %v1015 = vsel %vm743, 0.562617, 0.44070983
      %v1016 = vsel %vm760, %v984, %v1000
      %v1017 = vsel %vm761, %v985, %v1001
      %v1018 = vsel %vm762, %v986, %v1002
      %v1019 = vsel %vm763, %v987, %v1003
      %v1020 = vsel %vm764, %v988, %v1004
      %v1021 = vsel %vm765, %v989, %v1005
      %v1022 = vsel %vm766, %v990, %v1006
      %v1023 = vsel %vm767, %v991, %v1007
      %v1024 = vsel %vm768, %v992, %v1008
      %v1025 = vsel %vm769, %v993, %v1009
      %v1026 = vsel %vm770, %v994, %v1010
      %v1027 = vsel %vm771, %v995, %v1011
      %v1028 = vsel %vm772, %v996, %v1012
      %v1029 = vsel %vm773, %v997, %v1013
      %v1030 = vsel %vm774, %v998, %v1014
      %v1031 = vsel %vm775, %v999, %v1015
      %v1032 = vsel %vm792, %v920, %v872
      %v1033 = vsel %vm793, %v921, %v873
      %v1034 = vsel %vm794, %v922, %v874
      %v1035 = vsel %vm795, %v923, %v875
      %v1036 = vsel %vm796, %v924, %v876
      %v1037 = vsel %vm797, %v925, %v877
      %v1038 = vsel %vm798, %v926, %v878
      %v1039 = vsel %vm799, %v927, %v879
      %v1040 = vsel %vm800, %v928, %v880
      %v1041 = vsel %vm801, %v929, %v881
      %v1042 = vsel %vm802, %v930, %v882
      %v1043 = vsel %vm803, %v931, %v883
      %v1044 = vsel %vm804, %v932, %v884
      %v1045 = vsel %vm805, %v933, %v885
      %v1046 = vsel %vm806, %v934, %v886
      %v1047 = vsel %vm807, %v935, %v887
      %v1048 = vsel %vm792, %v1016, %v968
      %v1049 = vsel %vm793, %v1017, %v969
      %v1050 = vsel %vm794, %v1018, %v970
      %v1051 = vsel %vm795, %v1019, %v971
      %v1052 = vsel %vm796, %v1020, %v972
      %v1053 = vsel %vm797, %v1021, %v973
      %v1054 = vsel %vm798, %v1022, %v974
      %v1055 = vsel %vm799, %v1023, %v975
      %v1056 = vsel %vm800, %v1024, %v976
      %v1057 = vsel %vm801, %v1025, %v977
      %v1058 = vsel %vm802, %v1026, %v978
      %v1059 = vsel %vm803, %v1027, %v979
      %v1060 = vsel %vm804, %v1028, %v980
      %v1061 = vsel %vm805, %v1029, %v981
      %v1062 = vsel %vm806, %v1030, %v982
      %v1063 = vsel %vm807, %v1031, %v983
      %v1064 = vsel %vm824, %v1048, %v1032
      %v1065 = vsel %vm825, %v1049, %v1033
      %v1066 = vsel %vm826, %v1050, %v1034
      %v1067 = vsel %vm827, %v1051, %v1035
      %v1068 = vsel %vm828, %v1052, %v1036
      %v1069 = vsel %vm829, %v1053, %v1037
      %v1070 = vsel %vm830, %v1054, %v1038
      %v1071 = vsel %vm831, %v1055, %v1039
      %v1072 = vsel %vm832, %v1056, %v1040
      %v1073 = vsel %vm833, %v1057, %v1041
      %v1074 = vsel %vm834, %v1058, %v1042
      %v1075 = vsel %vm835, %v1059, %v1043
      %v1076 = vsel %vm836, %v1060, %v1044
      %v1077 = vsel %vm837, %v1061, %v1045
      %v1078 = vsel %vm838, %v1062, %v1046
      %v1079 = vsel %vm839, %v1063, %v1047
      %v1080 = vmul.f32 %v696, %v166
      %v1081 = vmul.f32 %v697, %v172
      %v1082 = vmul.f32 %v698, %v178
      %v1083 = vmul.f32 %v699, %v184
      %v1084 = vmul.f32 %v700, %v190
      %v1085 = vmul.f32 %v701, %v196
      %v1086 = vmul.f32 %v702, %v202
      %v1087 = vmul.f32 %v703, %v208
      %v1088 = vmul.f32 %v704, %v214
      %v1089 = vmul.f32 %v705, %v220
      %v1090 = vmul.f32 %v706, %v226
      %v1091 = vmul.f32 %v707, %v232
      %v1092 = vmul.f32 %v708, %v238
      %v1093 = vmul.f32 %v709, %v244
      %v1094 = vmul.f32 %v710, %v250
      %v1095 = vmul.f32 %v711, %v256
      %v1096 = vpack.c.bf16 %v1081, %v1080
      %v1097 = vpack.c.bf16 %v1083, %v1082
      %v1098 = vpack.c.bf16 %v1085, %v1084
      %v1099 = vpack.c.bf16 %v1087, %v1086
      %v1100 = vpack.c.bf16 %v1089, %v1088
      %v1101 = vpack.c.bf16 %v1091, %v1090
      %v1102 = vpack.c.bf16 %v1093, %v1092
      %v1103 = vpack.c.bf16 %v1095, %v1094
      %1104 = vst [vmem:[#allocation2] sm:$0xff] %v1096
      %1105 = vst [vmem:[#allocation2 + $0x10] sm:$0xff] %v1097
      %1106 = vst [vmem:[#allocation2 + $0x20] sm:$0xff] %v1098
      %1107 = vst [vmem:[#allocation2 + $0x30] sm:$0xff] %v1099
      %1108 = vst [vmem:[#allocation2 + $0x40] sm:$0xff] %v1100
      %1109 = vst [vmem:[#allocation2 + $0x50] sm:$0xff] %v1101
      %1110 = vst [vmem:[#allocation2 + $0x60] sm:$0xff] %v1102
      %1111 = vst [vmem:[#allocation2 + $0x70] sm:$0xff] %v1103
      %v1112 = vmul.f32 %v1064, %v168
      %v1113 = vmul.f32 %v1065, %v174
      %v1114 = vmul.f32 %v1066, %v180
      %v1115 = vmul.f32 %v1067, %v186
      %v1116 = vmul.f32 %v1068, %v192
      %v1117 = vmul.f32 %v1069, %v198
      %v1118 = vmul.f32 %v1070, %v204
      %v1119 = vmul.f32 %v1071, %v210
      %v1120 = vmul.f32 %v1072, %v216
      %v1121 = vmul.f32 %v1073, %v222
      %v1122 = vmul.f32 %v1074, %v228
      %v1123 = vmul.f32 %v1075, %v234
      %v1124 = vmul.f32 %v1076, %v240
      %v1125 = vmul.f32 %v1077, %v246
      %v1126 = vmul.f32 %v1078, %v252
      %v1127 = vmul.f32 %v1079, %v258
      %v1128 = vpack.c.bf16 %v1113, %v1112
      %v1129 = vpack.c.bf16 %v1115, %v1114
      %v1130 = vpack.c.bf16 %v1117, %v1116
      %v1131 = vpack.c.bf16 %v1119, %v1118
      %v1132 = vpack.c.bf16 %v1121, %v1120
      %v1133 = vpack.c.bf16 %v1123, %v1122
      %v1134 = vpack.c.bf16 %v1125, %v1124
      %v1135 = vpack.c.bf16 %v1127, %v1126
      %1136 = vst [vmem:[#allocation2 + $0x8] sm:$0xff] %v1128
      %1137 = vst [vmem:[#allocation2 + $0x18] sm:$0xff] %v1129
      %1138 = vst [vmem:[#allocation2 + $0x28] sm:$0xff] %v1130
      %1139 = vst [vmem:[#allocation2 + $0x38] sm:$0xff] %v1131
      %1140 = vst [vmem:[#allocation2 + $0x48] sm:$0xff] %v1132
      %1141 = vst [vmem:[#allocation2 + $0x58] sm:$0xff] %v1133
      %1142 = vst [vmem:[#allocation2 + $0x68] sm:$0xff] %v1134
      %1143 = vst [vmem:[#allocation2 + $0x78] sm:$0xff] %v1135
    $region25: #{tpu_custom_call.1} parent=1 // pred_fallthru
      _
    %s1144 = smul.u32 0, 16
    %s1145 = sshra.s32 %s1144, 3
    %s1146 = sand.u32 %s1144, 7
    %s1147 = smul.u32 %s1145, 2
    %s1148 = smul.addr %s1147, 4
    %s1149 = scalar_lea.vmem %s0, %s1148
    %v1150 = vld [vmem:[%s1149] sm:$0xff]
    %v1151 = vld [vmem:[%s1149 + $0x8] sm:$0xff]
    %v1152 = vld [vmem:[#allocation2] sm:$0xff]
    %v1153 = vld [vmem:[#allocation2 + $0x8] sm:$0xff]
    %v1154 = vld [vmem:[#allocation2 + $0x10] sm:$0xff]
    %v1155 = vld [vmem:[#allocation2 + $0x18] sm:$0xff]
    %v1156 = vld [vmem:[#allocation2 + $0x20] sm:$0xff]
    %v1157 = vld [vmem:[#allocation2 + $0x28] sm:$0xff]
    %v1158 = vld [vmem:[#allocation2 + $0x30] sm:$0xff]
    %v1159 = vld [vmem:[#allocation2 + $0x38] sm:$0xff]
    %v1160 = vld [vmem:[#allocation2 + $0x40] sm:$0xff]
    %v1161 = vld [vmem:[#allocation2 + $0x48] sm:$0xff]
    %v1162 = vld [vmem:[#allocation2 + $0x50] sm:$0xff]
    %v1163 = vld [vmem:[#allocation2 + $0x58] sm:$0xff]
    %v1164 = vld [vmem:[#allocation2 + $0x60] sm:$0xff]
    %v1165 = vld [vmem:[#allocation2 + $0x68] sm:$0xff]
    %v1166 = vld [vmem:[#allocation2 + $0x70] sm:$0xff]
    %v1167 = vld [vmem:[#allocation2 + $0x78] sm:$0xff]
    %v1168 = vld [vmem:[%s4] sm:$0x1]
    %v1170 = vlaneseq
    %v1171 = vshrl.u32 %v1170, 7
    %v1172 = vsub.s32 0, %v1171
    %v1173 = vrot.slane %v1168, %v1172
    %v1177 = vunpack.c.l.b16 %v1150
    %v1178 = vunpack.c.h.b16 %v1150
    %v1179 = vunpack.c.l.b16 %v1151
    %v1180 = vunpack.c.h.b16 %v1151
    %v1181 = vpack.c.b16 %v1179, %v1177
    %v1182 = vpack.c.b16 %v1180, %v1178
    %1185 = vmatprep.subr.bf16.mxu0 %v1153
    %1186 = vmatpush1.bf16.xpose.msra.mxu0 %v1152
    %1187 = vmatprep.subr.bf16.mxu0 %v1155
    %1188 = vmatpush1.bf16.xpose.msra.mxu0 %v1154
    %1189 = vmatprep.subr.bf16.mxu0 %v1157
    %1190 = vmatpush1.bf16.xpose.msra.mxu0 %v1156
    %1191 = vmatprep.subr.bf16.mxu0 %v1159
    %1192 = vmatpush1.bf16.xpose.msra.mxu0 %v1158
    %1193 = vmatprep.subr.bf16.mxu0 %v1161
    %1194 = vmatpush1.bf16.xpose.msra.mxu0 %v1160
    %1195 = vmatprep.subr.bf16.mxu0 %v1163
    %1196 = vmatpush1.bf16.xpose.msra.mxu0 %v1162
    %1197 = vmatprep.subr.bf16.mxu0 %v1165
    %1198 = vmatpush1.bf16.xpose.msra.mxu0 %v1164
    %1199 = vmatprep.subr.bf16.mxu0 %v1167
    %1200 = vmatpush1.bf16.xpose.msra.mxu0 %v1166
    %1201 = vmatprep.subr.bf16.mxu0 0
    %1202 = vmatpush1.bf16.xpose.msra.mxu0 0
    %1203 = vmatprep.subr.bf16.mxu0 0
    %1204 = vmatpush1.bf16.xpose.msra.mxu0 0
    %1205 = vmatprep.subr.bf16.mxu0 0
    %1206 = vmatpush1.bf16.xpose.msra.mxu0 0
    %1207 = vmatprep.subr.bf16.mxu0 0
    %1208 = vmatpush1.bf16.xpose.msra.mxu0 0
    %1209 = vmatprep.subr.bf16.mxu0 0
    %1210 = vmatpush1.bf16.xpose.msra.mxu0 0
    %1211 = vmatprep.subr.bf16.mxu0 0
    %1212 = vmatpush1.bf16.xpose.msra.mxu0 0
    %1213 = vmatprep.subr.bf16.mxu0 0
    %1214 = vmatpush1.bf16.xpose.msra.mxu0 0
    %1215 = vmatprep.subr.bf16.mxu0 0
    %1216 = vmatpush1.bf16.xpose.msra.mxu0 0
    %1217 = vmatprep.mubr.bf16.mxu0 %v1182
    %1218 = vmatmul.mubr.bf16.gmra.mrb[0].mxu0 %v1181
    %v1219 = vpop.f32.mrb[0].mxu0
    %v1220 = vadd.f32 %v1173, %v1219
    %v1221 = vpop.f32.mrb[0].mxu0
    %v1222 = vpop.f32.mrb[0].mxu0
    %v1223 = vadd.f32 %v1173, %v1222
    %v1224 = vpop.f32.mrb[0].mxu0
    %1225 = vdwg.mxu0
    %1226 = vst [vmem:[#allocation3] sm:$0xff] %v1220
    %1227 = vst [vmem:[#allocation3 + $0x8] sm:$0xff] %v1223
    // Predicated region
    $region26: #{tpu_custom_call.1} parent=1 // pred_check
      _
    $region27: #{tpu_custom_call.1} parent=1 // pred_check_branch
      %1229 = sbr.rel (0) target = $region29
    $region28: #{tpu_custom_call.1} parent=1 // pred_region
      %s1231 = ssub.s32 256, 256
      %1232 = vsyncadd [#allocation4], %s1231
      %s1233 = sshll.u32 [#allocation3], 4
      %s1234 = int_to_ptr.vmem [resolvable:$true] %s1233
      %1239 = dma.vmem_to_hbm [thread:$0]  %s1234, 256, %s5, [#allocation4], 128, 128, 8
    $region29: #{tpu_custom_call.1} parent=1 // pred_fallthru
      _
    // Predicated region
    $region30: #{tpu_custom_call.1} parent=1 // pred_check
      _
    $region31: #{tpu_custom_call.1} parent=1 // pred_check_branch
      %1241 = sbr.rel (0) target = $region33
    $region32: #{tpu_custom_call.1} parent=1 // pred_region
      %1242 = dma.done [#allocation4], 256
    $region33: #{tpu_custom_call.1} parent=1 // pred_fallthru
      _
    %1243 = vsyncpa [#allocation4], 1

</llo_original>
